<compile_context>
chip_gen: v7x
topology: tpu7x:2x2x1
jax: 0.10.0
libtpu: 0.0.40
codegen_flags: <defaults>
</compile_context>

<pallas_src>
import jax
import jax.numpy as jnp
from jax.experimental import pallas as pl
from jax.experimental.pallas import tpu as pltpu

IN_FEATURES = 28 * 28          # 784
H1, H2, N_CLASSES = 512, 256, 10
N_PAD = 128                    # lane-dense output width (last layer zero-padded)
TB_MAX = 1024                  # max batch-tile rows (amortizes ~0.35 us/step overhead)


def _round_up(x, m):
    return (x + m - 1) // m * m


def _choose_tiling(B):
    """Pick (n_tiles, tb, Bp): even tile count >= 2 for v7x megacore when the batch
    is big enough, 8-aligned tiles, and < 8 rows of padding per tile."""
    n_tiles = pl.cdiv(B, TB_MAX)
    if B >= 16:
        n_tiles = max(2, n_tiles)
        n_tiles += n_tiles % 2          # even -> balanced across v7x's 2 TensorCores
    tb = _round_up(pl.cdiv(B, n_tiles), 8)
    Bp = n_tiles * tb
    return n_tiles, tb, Bp


def mlp_kernel(x_ref, w1_ref, b1_ref, w2_ref, b2_ref, w3_ref, b3_ref, o_ref):
    # x_ref: [TB, 784] f32 (bf16 cast happens here -> no HBM copy of the input)
    # w1: [784, 512] bf16   b1: [1, 512] f32
    # w2: [512, 256] bf16   b2: [1, 256] f32
    # w3: [256, 128] bf16   b3: [1, 128] f32
    # o_ref: [TB, 128] bf16 (columns 10..127 are zero-padding)
    x = x_ref[...].astype(jnp.bfloat16)
    h1 = jnp.dot(x, w1_ref[...], preferred_element_type=jnp.float32) + b1_ref[...]
    h1 = jnp.maximum(h1, 0.0).astype(jnp.bfloat16)
    h2 = jnp.dot(h1, w2_ref[...], preferred_element_type=jnp.float32) + b2_ref[...]
    h2 = jnp.maximum(h2, 0.0).astype(jnp.bfloat16)
    o = jnp.dot(h2, w3_ref[...], preferred_element_type=jnp.float32) + b3_ref[...]
    o_ref[...] = o.astype(o_ref.dtype)


def pack_params(params):
    """One-time layout prep (call ONCE, outside the per-call forward):
    bf16 weights [in, out], f32 biases [1, out], last layer padded 10 -> 128."""
    w1, b1, w2, b2, w3, b3 = params
    return (
        w1.astype(jnp.bfloat16),
        b1.astype(jnp.float32),
        w2.astype(jnp.bfloat16),
        b2.astype(jnp.float32),
        jnp.pad(w3, ((0, 0), (0, N_PAD - N_CLASSES))).astype(jnp.bfloat16),
        jnp.pad(b3, ((0, 0), (0, N_PAD - N_CLASSES))).astype(jnp.float32),
    )


def mnist_net_forward(x, packed_params):
    """x: [B, 1, 28, 28] or [B, 784] float32. packed_params from pack_params().
    Returns logits [B, 10] float32."""
    w1p, b1p, w2p, b2p, w3p, b3p = packed_params
    x2d = x.reshape(-1, IN_FEATURES)          # mirrors x.view(-1, 784)
    B = x2d.shape[0]

    n_tiles, tb, Bp = _choose_tiling(B)
    # Only the (< tb rows of) batch padding is materialized; no dtype/K padding of x.
    xp = x2d.astype(jnp.float32)
    if Bp != B:
        xp = jnp.pad(xp, ((0, Bp - B), (0, 0)))

    # Weights/biases are small (~1.2 MiB bf16) -> fully resident; constant
    # index_map means no re-fetch across batch tiles.
    full = lambda a: pl.BlockSpec(a.shape, lambda i: (0, 0))

    flops = 2 * Bp * (IN_FEATURES * H1 + H1 * H2 + H2 * N_PAD)
    bytes_accessed = (
        xp.size * 4                                   # f32 input, read once
        + w1p.size * 2 + w2p.size * 2 + w3p.size * 2  # bf16 weights
        + (b1p.size + b2p.size + b3p.size) * 4        # f32 biases
        + Bp * N_PAD * 2                              # bf16 output
    )

    out = pl.pallas_call(
        mlp_kernel,
        out_shape=jax.ShapeDtypeStruct((Bp, N_PAD), jnp.bfloat16),
        grid_spec=pltpu.PrefetchScalarGridSpec(
            num_scalar_prefetch=0,
            grid=(n_tiles,),
            in_specs=[
                pl.BlockSpec((tb, IN_FEATURES), lambda i: (i, 0)),  # x tile (f32)
                full(w1p), full(b1p),
                full(w2p), full(b2p),
                full(w3p), full(b3p),
            ],
            out_specs=pl.BlockSpec((tb, N_PAD), lambda i: (i, 0)),
        ),
        compiler_params=pltpu.CompilerParams(
            dimension_semantics=("parallel",),       # batch tiles shard across TCs (v7x)
            vmem_limit_bytes=48 * 1024 * 1024,       # fits v7x's 64 MiB, ample on v5e/v6e
        ),
        cost_estimate=pl.CostEstimate(
            flops=flops, transcendentals=0, bytes_accessed=bytes_accessed),
    )(xp, w1p, b1p, w2p, b2p, w3p, b3p)

    # Tiny slice/cast; consumers that tolerate bf16/padded logits can skip this.
    return out[:B, :N_CLASSES].astype(jnp.float32)


def init_params(key):
    """Deterministic init matching nn.Linear shapes (uniform +-1/sqrt(fan_in))."""
    dims = [(IN_FEATURES, H1), (H1, H2), (H2, N_CLASSES)]
    params = []
    for idx, (fan_in, fan_out) in enumerate(dims):
        kw, kb = jax.random.split(jax.random.fold_in(key, idx))
        bound = 1.0 / jnp.sqrt(fan_in)
        w = jax.random.uniform(kw, (fan_in, fan_out), jnp.float32, -bound, bound)
        b = jax.random.uniform(kb, (1, fan_out), jnp.float32, -bound, bound)
        params += [w, b]
    return tuple(params)


def reference_forward(x, params, dtype=jnp.float32):
    """Pure-JAX reference. dtype=bfloat16 mirrors the kernel's compute precision."""
    w1, b1, w2, b2, w3, b3 = params
    h = x.reshape(-1, IN_FEATURES).astype(dtype)
    h = jnp.maximum(
        jnp.dot(h, w1.astype(dtype), preferred_element_type=jnp.float32) + b1, 0.0)
    h = jnp.maximum(
        jnp.dot(h.astype(dtype), w2.astype(dtype),
                preferred_element_type=jnp.float32) + b2, 0.0)
    return jnp.dot(h.astype(dtype), w3.astype(dtype),
                   preferred_element_type=jnp.float32) + b3


if __name__ == "__main__":
    key = jax.random.PRNGKey(0)
    kx, kp = jax.random.split(key)
    params = init_params(kp)
    packed = jax.block_until_ready(pack_params(params))   # one-time weight packing

    fwd = jax.jit(mnist_net_forward)

    # Small demo batch plus a larger batch exercising the multi-tile (grid >= 2) path.
    for batch in (4, 1024):
        x = jax.random.normal(jax.random.fold_in(kx, batch),
                              (batch, 1, 28, 28), jnp.float32)
        out = jax.block_until_ready(fwd(x, packed))
        assert out.shape == (batch, 10)

        # Tight check vs a reference using identical bf16-compute / f32-accum numerics.
        ref_bf16 = reference_forward(x, params, dtype=jnp.bfloat16)
        assert jnp.allclose(out, ref_bf16, atol=3e-2, rtol=3e-2), "bf16-matched mismatch"

        # Loose sanity check vs the full f32 PyTorch-equivalent forward.
        ref_f32 = reference_forward(x, params, dtype=jnp.float32)
        assert jnp.allclose(out, ref_f32, atol=1e-1, rtol=1e-1), "f32 reference mismatch"

    print("KERNEL_OK")
</pallas_src>

<mosaic_0001>
module attributes {stable_mosaic.version = 11 : i64} {
  func.func @mlp_kernel(%arg0: i32, %arg1: memref<8x784xf32, #tpu.memory_space<vmem>>, %arg2: memref<784x512xbf16, #tpu.memory_space<vmem>>, %arg3: memref<1x512xf32, #tpu.memory_space<vmem>>, %arg4: memref<512x256xbf16, #tpu.memory_space<vmem>>, %arg5: memref<1x256xf32, #tpu.memory_space<vmem>>, %arg6: memref<256x128xbf16, #tpu.memory_space<vmem>>, %arg7: memref<1x128xf32, #tpu.memory_space<vmem>>, %arg8: memref<8x128xbf16, #tpu.memory_space<vmem>>) attributes {dimension_semantics = [#tpu.dimension_semantics<parallel>], iteration_bounds = array<i64: 1>, scalar_prefetch = 0 : i64, scratch_operands = 0 : i64, tpu.core_type = #tpu.core_type<tc>, window_params = [{transform_indices = @transform_0, window_bounds = array<i64: 8, 784>}, {pipeline_mode = #tpu.pipeline_mode<synchronous>, transform_indices = @transform_1, window_bounds = array<i64: 784, 512>}, {pipeline_mode = #tpu.pipeline_mode<synchronous>, transform_indices = @transform_2, window_bounds = array<i64: 1, 512>}, {pipeline_mode = #tpu.pipeline_mode<synchronous>, transform_indices = @transform_3, window_bounds = array<i64: 512, 256>}, {pipeline_mode = #tpu.pipeline_mode<synchronous>, transform_indices = @transform_4, window_bounds = array<i64: 1, 256>}, {pipeline_mode = #tpu.pipeline_mode<synchronous>, transform_indices = @transform_5, window_bounds = array<i64: 256, 128>}, {pipeline_mode = #tpu.pipeline_mode<synchronous>, transform_indices = @transform_6, window_bounds = array<i64: 1, 128>}, {transform_indices = @transform_7, window_bounds = array<i64: 8, 128>}]} {
    %c0 = arith.constant 0 : index
    %c0_0 = arith.constant 0 : index
    %0 = vector.load %arg1[%c0, %c0_0] : memref<8x784xf32, #tpu.memory_space<vmem>>, vector<8x784xf32>
    %1 = arith.truncf %0 : vector<8x784xf32> to vector<8x784xbf16>
    %c0_1 = arith.constant 0 : index
    %c0_2 = arith.constant 0 : index
    %2 = vector.load %arg2[%c0_1, %c0_2] : memref<784x512xbf16, #tpu.memory_space<vmem>>, vector<784x512xbf16>
    %cst = arith.constant dense<0.000000e+00> : vector<8x512xf32>
    %3 = tpu.matmul %1, %2, %cst {dimension_numbers = #tpu.dot_dimension_numbers<[1], [0], [0], [1], [0, 0, 1, 1], [], []>} : vector<8x784xbf16>, vector<784x512xbf16>, vector<8x512xf32> -> vector<8x512xf32>
    %c0_3 = arith.constant 0 : index
    %c0_4 = arith.constant 0 : index
    %4 = vector.load %arg3[%c0_3, %c0_4] : memref<1x512xf32, #tpu.memory_space<vmem>>, vector<1x512xf32>
    %5 = vector.broadcast %4 : vector<1x512xf32> to vector<8x512xf32>
    %6 = arith.addf %3, %5 : vector<8x512xf32>
    %cst_5 = arith.constant 0.000000e+00 : f32
    %7 = vector.broadcast %cst_5 : f32 to vector<8x512xf32>
    %8 = arith.maximumf %6, %7 : vector<8x512xf32>
    %9 = arith.truncf %8 : vector<8x512xf32> to vector<8x512xbf16>
    %c0_6 = arith.constant 0 : index
    %c0_7 = arith.constant 0 : index
    %10 = vector.load %arg4[%c0_6, %c0_7] : memref<512x256xbf16, #tpu.memory_space<vmem>>, vector<512x256xbf16>
    %cst_8 = arith.constant dense<0.000000e+00> : vector<8x256xf32>
    %11 = tpu.matmul %9, %10, %cst_8 {dimension_numbers = #tpu.dot_dimension_numbers<[1], [0], [0], [1], [0, 0, 1, 1], [], []>} : vector<8x512xbf16>, vector<512x256xbf16>, vector<8x256xf32> -> vector<8x256xf32>
    %c0_9 = arith.constant 0 : index
    %c0_10 = arith.constant 0 : index
    %12 = vector.load %arg5[%c0_9, %c0_10] : memref<1x256xf32, #tpu.memory_space<vmem>>, vector<1x256xf32>
    %13 = vector.broadcast %12 : vector<1x256xf32> to vector<8x256xf32>
    %14 = arith.addf %11, %13 : vector<8x256xf32>
    %cst_11 = arith.constant 0.000000e+00 : f32
    %15 = vector.broadcast %cst_11 : f32 to vector<8x256xf32>
    %16 = arith.maximumf %14, %15 : vector<8x256xf32>
    %17 = arith.truncf %16 : vector<8x256xf32> to vector<8x256xbf16>
    %c0_12 = arith.constant 0 : index
    %c0_13 = arith.constant 0 : index
    %18 = vector.load %arg6[%c0_12, %c0_13] : memref<256x128xbf16, #tpu.memory_space<vmem>>, vector<256x128xbf16>
    %cst_14 = arith.constant dense<0.000000e+00> : vector<8x128xf32>
    %19 = tpu.matmul %17, %18, %cst_14 {dimension_numbers = #tpu.dot_dimension_numbers<[1], [0], [0], [1], [0, 0, 1, 1], [], []>} : vector<8x256xbf16>, vector<256x128xbf16>, vector<8x128xf32> -> vector<8x128xf32>
    %c0_15 = arith.constant 0 : index
    %c0_16 = arith.constant 0 : index
    %20 = vector.load %arg7[%c0_15, %c0_16] : memref<1x128xf32, #tpu.memory_space<vmem>>, vector<1x128xf32>
    %21 = vector.broadcast %20 : vector<1x128xf32> to vector<8x128xf32>
    %22 = arith.addf %19, %21 : vector<8x128xf32>
    %23 = arith.truncf %22 : vector<8x128xf32> to vector<8x128xbf16>
    %c0_17 = arith.constant 0 : index
    %c0_18 = arith.constant 0 : index
    %24 = vector.load %arg8[%c0_17, %c0_18] : memref<8x128xbf16, #tpu.memory_space<vmem>>, vector<8x128xbf16>
    tpu.vector_store %arg8[%c0_17, %c0_18], %23 {strides = array<i32>} : memref<8x128xbf16, #tpu.memory_space<vmem>>, vector<8x128xbf16>,
    return
  }
  func.func @transform_0(%arg0: i32) -> (i32, i32) {
    %c0_i32 = arith.constant 0 : i32
    %c0_i32_0 = arith.constant 0 : i32
    return %arg0, %c0_i32 : i32, i32
  }
  func.func @transform_1(%arg0: i32) -> (i32, i32) {
    %c0_i32 = arith.constant 0 : i32
    %c0_i32_0 = arith.constant 0 : i32
    %c0_i32_1 = arith.constant 0 : i32
    return %c0_i32, %c0_i32_0 : i32, i32
  }
  func.func @transform_2(%arg0: i32) -> (i32, i32) {
    %c0_i32 = arith.constant 0 : i32
    %c0_i32_0 = arith.constant 0 : i32
    %c0_i32_1 = arith.constant 0 : i32
    return %c0_i32, %c0_i32_0 : i32, i32
  }
  func.func @transform_3(%arg0: i32) -> (i32, i32) {
    %c0_i32 = arith.constant 0 : i32
    %c0_i32_0 = arith.constant 0 : i32
    %c0_i32_1 = arith.constant 0 : i32
    return %c0_i32, %c0_i32_0 : i32, i32
  }
  func.func @transform_4(%arg0: i32) -> (i32, i32) {
    %c0_i32 = arith.constant 0 : i32
    %c0_i32_0 = arith.constant 0 : i32
    %c0_i32_1 = arith.constant 0 : i32
    return %c0_i32, %c0_i32_0 : i32, i32
  }
  func.func @transform_5(%arg0: i32) -> (i32, i32) {
    %c0_i32 = arith.constant 0 : i32
    %c0_i32_0 = arith.constant 0 : i32
    %c0_i32_1 = arith.constant 0 : i32
    return %c0_i32, %c0_i32_0 : i32, i32
  }
  func.func @transform_6(%arg0: i32) -> (i32, i32) {
    %c0_i32 = arith.constant 0 : i32
    %c0_i32_0 = arith.constant 0 : i32
    %c0_i32_1 = arith.constant 0 : i32
    return %c0_i32, %c0_i32_0 : i32, i32
  }
  func.func @transform_7(%arg0: i32) -> (i32, i32) {
    %c0_i32 = arith.constant 0 : i32
    %c0_i32_0 = arith.constant 0 : i32
    return %arg0, %c0_i32 : i32, i32
  }
}

</mosaic_0001>

<llo_original>
// kernel: mnist_net_forward.1
$region0: #{mnist_net_forward.1}
  #allocation0 [shape = 'u32[]', space=smem, size = 0x4, offset = 0x4, fixed_abs, tag = 'smem constant byte address 0x4 - core index']
  #allocation1 [shape = 'u32[144,128]{1,0:T(1,128)}', space=vmem, size = 0x12000, scoped, tag = 'internal scratch']
  %s0 = inlined_call_operand.vmem [shape: f32[8,784], index: 0, kind: input, shape index: {}]
  %s1 = inlined_call_operand.hbm [shape: bf16[784,512], index: 1, kind: input, shape index: {}]
  %s2 = inlined_call_operand.vmem [shape: f32[1,512], index: 2, kind: input, shape index: {}]
  %s3 = inlined_call_operand.hbm [shape: bf16[512,256], index: 3, kind: input, shape index: {}]
  %s4 = inlined_call_operand.vmem [shape: f32[1,256], index: 4, kind: input, shape index: {}]
  %s5 = inlined_call_operand.vmem [shape: bf16[256,128], index: 5, kind: input, shape index: {}]
  %s6 = inlined_call_operand.vmem [shape: f32[1,128], index: 6, kind: input, shape index: {}]
  %s7 = inlined_call_operand.vmem [shape: bf16[8,128], index: 7, kind: output, shape index: {}]
  %s8 = sld [smem:[#allocation0]]
  $region46: #{mnist_net_forward.1} parent=0
    _
  %s10 = ssub.s32 1, %s8
  %s11 = scalar_select 0, %s10, %s8
  $region1: #{mnist_net_forward.1} parent=0
    #allocation2 [shape = 'u8[802816]{0}', space=vmem, size = 0xc4000, scoped, tag = 'input window, operand 1, single buffered']
    #allocation3 [shape = 's32[1]{0}', space=sflag, size = 0x4, scoped, tag = 'scoped memory for mnist_net_forward.1']
    #allocation4 [shape = 'u8[262144]{0}', space=vmem, size = 0x40000, scoped, tag = 'input window, operand 3, single buffered']
    #allocation5 [shape = 's32[1]{0}', space=sflag, size = 0x4, scoped, tag = 'scoped memory for mnist_net_forward.1']
    %12 = vsyncpa [#allocation3], 0
    %13 = vsyncpa [#allocation5], 0
    // Predicated region
    $region2: #{mnist_net_forward.1} parent=1 // pred_check
      _
    $region3: #{mnist_net_forward.1} parent=1 // pred_check_branch
      %15 = sbr.rel (0) target = $region5
    $region4: #{mnist_net_forward.1} parent=1 // pred_region
      _
    $region5: #{mnist_net_forward.1} parent=1 // pred_fallthru
      _
    // Predicated region
    $region6: #{mnist_net_forward.1} parent=1 // pred_check
      _
    $region7: #{mnist_net_forward.1} parent=1 // pred_check_branch
      %17 = sbr.rel (0) target = $region9
    $region8: #{mnist_net_forward.1} parent=1 // pred_region
      %s19 = ssub.s32 25088, 25088
      %20 = vsyncadd [#allocation3], %s19
      %s21 = sshll.u32 [#allocation2], 4
      %s22 = int_to_ptr.vmem [resolvable:$true] %s21
      %27 = dma.hbm_to_vmem [thread:$0]  %s1, 25088, %s22, [#allocation3], 256, 256, 16
    $region9: #{mnist_net_forward.1} parent=1 // pred_fallthru
      _
    // Predicated region
    $region10: #{mnist_net_forward.1} parent=1 // pred_check
      _
    $region11: #{mnist_net_forward.1} parent=1 // pred_check_branch
      %29 = sbr.rel (0) target = $region13
    $region12: #{mnist_net_forward.1} parent=1 // pred_region
      _
    $region13: #{mnist_net_forward.1} parent=1 // pred_fallthru
      _
    // Predicated region
    $region14: #{mnist_net_forward.1} parent=1 // pred_check
      _
    $region15: #{mnist_net_forward.1} parent=1 // pred_check_branch
      %31 = sbr.rel (0) target = $region17
    $region16: #{mnist_net_forward.1} parent=1 // pred_region
      %s33 = ssub.s32 8192, 8192
      %34 = vsyncadd [#allocation5], %s33
      %s35 = sshll.u32 [#allocation4], 4
      %s36 = int_to_ptr.vmem [resolvable:$true] %s35
      %41 = dma.hbm_to_vmem [thread:$0]  %s3, 8192, %s36, [#allocation5], 128, 128, 8
    $region17: #{mnist_net_forward.1} parent=1 // pred_fallthru
      _
    // Predicated region
    $region18: #{mnist_net_forward.1} parent=1 // pred_check
      _
    $region19: #{mnist_net_forward.1} parent=1 // pred_check_branch
      %43 = sbr.rel (0) target = $region21
    $region20: #{mnist_net_forward.1} parent=1 // pred_region
      _
    $region21: #{mnist_net_forward.1} parent=1 // pred_fallthru
      _
    // Predicated region
    $region22: #{mnist_net_forward.1} parent=1 // pred_check
      _
    $region23: #{mnist_net_forward.1} parent=1 // pred_check_branch
      %45 = sbr.rel (0) target = $region25
    $region24: #{mnist_net_forward.1} parent=1 // pred_region
      _
    $region25: #{mnist_net_forward.1} parent=1 // pred_fallthru
      _
    // Predicated region
    $region26: #{mnist_net_forward.1} parent=1 // pred_check
      _
    $region27: #{mnist_net_forward.1} parent=1 // pred_check_branch
      %47 = sbr.rel (0) target = $region29
    $region28: #{mnist_net_forward.1} parent=1 // pred_region
      _
    $region29: #{mnist_net_forward.1} parent=1 // pred_fallthru
      _
    // Predicated region
    $region30: #{mnist_net_forward.1} parent=1 // pred_check
      _
    $region31: #{mnist_net_forward.1} parent=1 // pred_check_branch
      %49 = sbr.rel (0) target = $region33
    $region32: #{mnist_net_forward.1} parent=1 // pred_region
      %50 = dma.done [#allocation3], 25088
    $region33: #{mnist_net_forward.1} parent=1 // pred_fallthru
      _
    // Predicated region
    $region34: #{mnist_net_forward.1} parent=1 // pred_check
      _
    $region35: #{mnist_net_forward.1} parent=1 // pred_check_branch
      %52 = sbr.rel (0) target = $region37
    $region36: #{mnist_net_forward.1} parent=1 // pred_region
      %53 = dma.done [#allocation5], 8192
    $region37: #{mnist_net_forward.1} parent=1 // pred_fallthru
      _
    %v55 = vld [vmem:[%s0] sm:$0xff]
    %v56 = vld [vmem:[%s0 + $0x8] sm:$0xff]
    %v57 = vld [vmem:[%s0 + $0x10] sm:$0xff]
    %v58 = vld [vmem:[%s0 + $0x18] sm:$0xff]
    %v59 = vld [vmem:[%s0 + $0x20] sm:$0xff]
    %v60 = vld [vmem:[%s0 + $0x28] sm:$0xff]
    %v61 = vld [vmem:[%s0 + $0x30] sm:$0xff]
    %v62 = vpack.c.bf16 %v55, %v55
    %v63 = vpack.c.bf16 %v56, %v56
    %v64 = vpack.c.bf16 %v57, %v57
    %v65 = vpack.c.bf16 %v58, %v58
    %v66 = vpack.c.bf16 %v59, %v59
    %v67 = vpack.c.bf16 %v60, %v60
    %v68 = vpack.c.bf16 %v61, %v61
    %v69 = vld [vmem:[#allocation2] sm:$0xff]
    %v70 = vld [vmem:[#allocation2 + $0x8] sm:$0xff]
    %v71 = vld [vmem:[#allocation2 + $0x10] sm:$0xff]
    %v72 = vld [vmem:[#allocation2 + $0x18] sm:$0xff]
    %v73 = vld [vmem:[#allocation2 + $0x20] sm:$0xff]
    %v74 = vld [vmem:[#allocation2 + $0x28] sm:$0xff]
    %v75 = vld [vmem:[#allocation2 + $0x30] sm:$0xff]
    %v76 = vld [vmem:[#allocation2 + $0x38] sm:$0xff]
    %v77 = vld [vmem:[#allocation2 + $0x40] sm:$0xff]
    %v78 = vld [vmem:[#allocation2 + $0x48] sm:$0xff]
    %v79 = vld [vmem:[#allocation2 + $0x50] sm:$0xff]
    %v80 = vld [vmem:[#allocation2 + $0x58] sm:$0xff]
    %v81 = vld [vmem:[#allocation2 + $0x60] sm:$0xff]
    %v82 = vld [vmem:[#allocation2 + $0x68] sm:$0xff]
    %v83 = vld [vmem:[#allocation2 + $0x70] sm:$0xff]
    %v84 = vld [vmem:[#allocation2 + $0x78] sm:$0xff]
    %v85 = vld [vmem:[#allocation2 + $0x80] sm:$0xff]
    %v86 = vld [vmem:[#allocation2 + $0x88] sm:$0xff]
    %v87 = vld [vmem:[#allocation2 + $0x90] sm:$0xff]
    %v88 = vld [vmem:[#allocation2 + $0x98] sm:$0xff]
    %v89 = vld [vmem:[#allocation2 + $0xa0] sm:$0xff]
    %v90 = vld [vmem:[#allocation2 + $0xa8] sm:$0xff]
    %v91 = vld [vmem:[#allocation2 + $0xb0] sm:$0xff]
    %v92 = vld [vmem:[#allocation2 + $0xb8] sm:$0xff]
    %v93 = vld [vmem:[#allocation2 + $0xc0] sm:$0xff]
    %v94 = vld [vmem:[#allocation2 + $0xc8] sm:$0xff]
    %v95 = vld [vmem:[#allocation2 + $0xd0] sm:$0xff]
    %v96 = vld [vmem:[#allocation2 + $0xd8] sm:$0xff]
    %v97 = vld [vmem:[#allocation2 + $0xe0] sm:$0xff]
    %v98 = vld [vmem:[#allocation2 + $0xe8] sm:$0xff]
    %v99 = vld [vmem:[#allocation2 + $0xf0] sm:$0xff]
    %v100 = vld [vmem:[#allocation2 + $0xf8] sm:$0xff]
    %v101 = vld [vmem:[#allocation2 + $0x100] sm:$0xff]
    %v102 = vld [vmem:[#allocation2 + $0x108] sm:$0xff]
    %v103 = vld [vmem:[#allocation2 + $0x110] sm:$0xff]
    %v104 = vld [vmem:[#allocation2 + $0x118] sm:$0xff]
    %v105 = vld [vmem:[#allocation2 + $0x120] sm:$0xff]
    %v106 = vld [vmem:[#allocation2 + $0x128] sm:$0xff]
    %v107 = vld [vmem:[#allocation2 + $0x130] sm:$0xff]
    %v108 = vld [vmem:[#allocation2 + $0x138] sm:$0xff]
    %v109 = vld [vmem:[#allocation2 + $0x140] sm:$0xff]
    %v110 = vld [vmem:[#allocation2 + $0x148] sm:$0xff]
    %v111 = vld [vmem:[#allocation2 + $0x150] sm:$0xff]
    %v112 = vld [vmem:[#allocation2 + $0x158] sm:$0xff]
    %v113 = vld [vmem:[#allocation2 + $0x160] sm:$0xff]
    %v114 = vld [vmem:[#allocation2 + $0x168] sm:$0xff]
    %v115 = vld [vmem:[#allocation2 + $0x170] sm:$0xff]
    %v116 = vld [vmem:[#allocation2 + $0x178] sm:$0xff]
    %v117 = vld [vmem:[#allocation2 + $0x180] sm:$0xff]
    %v118 = vld [vmem:[#allocation2 + $0x188] sm:$0xff]
    %v119 = vld [vmem:[#allocation2 + $0x190] sm:$0xff]
    %v120 = vld [vmem:[#allocation2 + $0x198] sm:$0xff]
    %v121 = vld [vmem:[#allocation2 + $0x1a0] sm:$0xff]
    %v122 = vld [vmem:[#allocation2 + $0x1a8] sm:$0xff]
    %v123 = vld [vmem:[#allocation2 + $0x1b0] sm:$0xff]
    %v124 = vld [vmem:[#allocation2 + $0x1b8] sm:$0xff]
    %v125 = vld [vmem:[#allocation2 + $0x1c0] sm:$0xff]
    %v126 = vld [vmem:[#allocation2 + $0x1c8] sm:$0xff]
    %v127 = vld [vmem:[#allocation2 + $0x1d0] sm:$0xff]
    %v128 = vld [vmem:[#allocation2 + $0x1d8] sm:$0xff]
    %v129 = vld [vmem:[#allocation2 + $0x1e0] sm:$0xff]
    %v130 = vld [vmem:[#allocation2 + $0x1e8] sm:$0xff]
    %v131 = vld [vmem:[#allocation2 + $0x1f0] sm:$0xff]
    %v132 = vld [vmem:[#allocation2 + $0x1f8] sm:$0xff]
    %v133 = vld [vmem:[#allocation2 + $0x200] sm:$0xff]
    %v134 = vld [vmem:[#allocation2 + $0x208] sm:$0xff]
    %v135 = vld [vmem:[#allocation2 + $0x210] sm:$0xff]
    %v136 = vld [vmem:[#allocation2 + $0x218] sm:$0xff]
    %v137 = vld [vmem:[#allocation2 + $0x220] sm:$0xff]
    %v138 = vld [vmem:[#allocation2 + $0x228] sm:$0xff]
    %v139 = vld [vmem:[#allocation2 + $0x230] sm:$0xff]
    %v140 = vld [vmem:[#allocation2 + $0x238] sm:$0xff]
    %v141 = vld [vmem:[#allocation2 + $0x240] sm:$0xff]
    %v142 = vld [vmem:[#allocation2 + $0x248] sm:$0xff]
    %v143 = vld [vmem:[#allocation2 + $0x250] sm:$0xff]
    %v144 = vld [vmem:[#allocation2 + $0x258] sm:$0xff]
    %v145 = vld [vmem:[#allocation2 + $0x260] sm:$0xff]
    %v146 = vld [vmem:[#allocation2 + $0x268] sm:$0xff]
    %v147 = vld [vmem:[#allocation2 + $0x270] sm:$0xff]
    %v148 = vld [vmem:[#allocation2 + $0x278] sm:$0xff]
    %v149 = vld [vmem:[#allocation2 + $0x280] sm:$0xff]
    %v150 = vld [vmem:[#allocation2 + $0x288] sm:$0xff]
    %v151 = vld [vmem:[#allocation2 + $0x290] sm:$0xff]
    %v152 = vld [vmem:[#allocation2 + $0x298] sm:$0xff]
    %v153 = vld [vmem:[#allocation2 + $0x2a0] sm:$0xff]
    %v154 = vld [vmem:[#allocation2 + $0x2a8] sm:$0xff]
    %v155 = vld [vmem:[#allocation2 + $0x2b0] sm:$0xff]
    %v156 = vld [vmem:[#allocation2 + $0x2b8] sm:$0xff]
    %v157 = vld [vmem:[#allocation2 + $0x2c0] sm:$0xff]
    %v158 = vld [vmem:[#allocation2 + $0x2c8] sm:$0xff]
    %v159 = vld [vmem:[#allocation2 + $0x2d0] sm:$0xff]
    %v160 = vld [vmem:[#allocation2 + $0x2d8] sm:$0xff]
    %v161 = vld [vmem:[#allocation2 + $0x2e0] sm:$0xff]
    %v162 = vld [vmem:[#allocation2 + $0x2e8] sm:$0xff]
    %v163 = vld [vmem:[#allocation2 + $0x2f0] sm:$0xff]
    %v164 = vld [vmem:[#allocation2 + $0x2f8] sm:$0xff]
    %v165 = vld [vmem:[#allocation2 + $0x300] sm:$0xff]
    %v166 = vld [vmem:[#allocation2 + $0x308] sm:$0xff]
    %v167 = vld [vmem:[#allocation2 + $0x310] sm:$0xff]
    %v168 = vld [vmem:[#allocation2 + $0x318] sm:$0xff]
    %v169 = vld [vmem:[#allocation2 + $0x320] sm:$0xff]
    %v170 = vld [vmem:[#allocation2 + $0x328] sm:$0xff]
    %v171 = vld [vmem:[#allocation2 + $0x330] sm:$0xff]
    %v172 = vld [vmem:[#allocation2 + $0x338] sm:$0xff]
    %v173 = vld [vmem:[#allocation2 + $0x340] sm:$0xff]
    %v174 = vld [vmem:[#allocation2 + $0x348] sm:$0xff]
    %v175 = vld [vmem:[#allocation2 + $0x350] sm:$0xff]
    %v176 = vld [vmem:[#allocation2 + $0x358] sm:$0xff]
    %v177 = vld [vmem:[#allocation2 + $0x360] sm:$0xff]
    %v178 = vld [vmem:[#allocation2 + $0x368] sm:$0xff]
    %v179 = vld [vmem:[#allocation2 + $0x370] sm:$0xff]
    %v180 = vld [vmem:[#allocation2 + $0x378] sm:$0xff]
    %v181 = vld [vmem:[#allocation2 + $0x380] sm:$0xff]
    %v182 = vld [vmem:[#allocation2 + $0x388] sm:$0xff]
    %v183 = vld [vmem:[#allocation2 + $0x390] sm:$0xff]
    %v184 = vld [vmem:[#allocation2 + $0x398] sm:$0xff]
    %v185 = vld [vmem:[#allocation2 + $0x3a0] sm:$0xff]
    %v186 = vld [vmem:[#allocation2 + $0x3a8] sm:$0xff]
    %v187 = vld [vmem:[#allocation2 + $0x3b0] sm:$0xff]
    %v188 = vld [vmem:[#allocation2 + $0x3b8] sm:$0xff]
    %v189 = vld [vmem:[#allocation2 + $0x3c0] sm:$0xff]
    %v190 = vld [vmem:[#allocation2 + $0x3c8] sm:$0xff]
    %v191 = vld [vmem:[#allocation2 + $0x3d0] sm:$0xff]
    %v192 = vld [vmem:[#allocation2 + $0x3d8] sm:$0xff]
    %v193 = vld [vmem:[#allocation2 + $0x3e0] sm:$0xff]
    %v194 = vld [vmem:[#allocation2 + $0x3e8] sm:$0xff]
    %v195 = vld [vmem:[#allocation2 + $0x3f0] sm:$0xff]
    %v196 = vld [vmem:[#allocation2 + $0x3f8] sm:$0xff]
    %v197 = vld [vmem:[#allocation2 + $0x400] sm:$0xff]
    %v198 = vld [vmem:[#allocation2 + $0x408] sm:$0xff]
    %v199 = vld [vmem:[#allocation2 + $0x410] sm:$0xff]
    %v200 = vld [vmem:[#allocation2 + $0x418] sm:$0xff]
    %v201 = vld [vmem:[#allocation2 + $0x420] sm:$0xff]
    %v202 = vld [vmem:[#allocation2 + $0x428] sm:$0xff]
    %v203 = vld [vmem:[#allocation2 + $0x430] sm:$0xff]
    %v204 = vld [vmem:[#allocation2 + $0x438] sm:$0xff]
    %v205 = vld [vmem:[#allocation2 + $0x440] sm:$0xff]
    %v206 = vld [vmem:[#allocation2 + $0x448] sm:$0xff]
    %v207 = vld [vmem:[#allocation2 + $0x450] sm:$0xff]
    %v208 = vld [vmem:[#allocation2 + $0x458] sm:$0xff]
    %v209 = vld [vmem:[#allocation2 + $0x460] sm:$0xff]
    %v210 = vld [vmem:[#allocation2 + $0x468] sm:$0xff]
    %v211 = vld [vmem:[#allocation2 + $0x470] sm:$0xff]
    %v212 = vld [vmem:[#allocation2 + $0x478] sm:$0xff]
    %v213 = vld [vmem:[#allocation2 + $0x480] sm:$0xff]
    %v214 = vld [vmem:[#allocation2 + $0x488] sm:$0xff]
    %v215 = vld [vmem:[#allocation2 + $0x490] sm:$0xff]
    %v216 = vld [vmem:[#allocation2 + $0x498] sm:$0xff]
    %v217 = vld [vmem:[#allocation2 + $0x4a0] sm:$0xff]
    %v218 = vld [vmem:[#allocation2 + $0x4a8] sm:$0xff]
    %v219 = vld [vmem:[#allocation2 + $0x4b0] sm:$0xff]
    %v220 = vld [vmem:[#allocation2 + $0x4b8] sm:$0xff]
    %v221 = vld [vmem:[#allocation2 + $0x4c0] sm:$0xff]
    %v222 = vld [vmem:[#allocation2 + $0x4c8] sm:$0xff]
    %v223 = vld [vmem:[#allocation2 + $0x4d0] sm:$0xff]
    %v224 = vld [vmem:[#allocation2 + $0x4d8] sm:$0xff]
    %v225 = vld [vmem:[#allocation2 + $0x4e0] sm:$0xff]
    %v226 = vld [vmem:[#allocation2 + $0x4e8] sm:$0xff]
    %v227 = vld [vmem:[#allocation2 + $0x4f0] sm:$0xff]
    %v228 = vld [vmem:[#allocation2 + $0x4f8] sm:$0xff]
    %v229 = vld [vmem:[#allocation2 + $0x500] sm:$0xff]
    %v230 = vld [vmem:[#allocation2 + $0x508] sm:$0xff]
    %v231 = vld [vmem:[#allocation2 + $0x510] sm:$0xff]
    %v232 = vld [vmem:[#allocation2 + $0x518] sm:$0xff]
    %v233 = vld [vmem:[#allocation2 + $0x520] sm:$0xff]
    %v234 = vld [vmem:[#allocation2 + $0x528] sm:$0xff]
    %v235 = vld [vmem:[#allocation2 + $0x530] sm:$0xff]
    %v236 = vld [vmem:[#allocation2 + $0x538] sm:$0xff]
    %v237 = vld [vmem:[#allocation2 + $0x540] sm:$0xff]
    %v238 = vld [vmem:[#allocation2 + $0x548] sm:$0xff]
    %v239 = vld [vmem:[#allocation2 + $0x550] sm:$0xff]
    %v240 = vld [vmem:[#allocation2 + $0x558] sm:$0xff]
    %v241 = vld [vmem:[#allocation2 + $0x560] sm:$0xff]
    %v242 = vld [vmem:[#allocation2 + $0x568] sm:$0xff]
    %v243 = vld [vmem:[#allocation2 + $0x570] sm:$0xff]
    %v244 = vld [vmem:[#allocation2 + $0x578] sm:$0xff]
    %v245 = vld [vmem:[#allocation2 + $0x580] sm:$0xff]
    %v246 = vld [vmem:[#allocation2 + $0x588] sm:$0xff]
    %v247 = vld [vmem:[#allocation2 + $0x590] sm:$0xff]
    %v248 = vld [vmem:[#allocation2 + $0x598] sm:$0xff]
    %v249 = vld [vmem:[#allocation2 + $0x5a0] sm:$0xff]
    %v250 = vld [vmem:[#allocation2 + $0x5a8] sm:$0xff]
    %v251 = vld [vmem:[#allocation2 + $0x5b0] sm:$0xff]
    %v252 = vld [vmem:[#allocation2 + $0x5b8] sm:$0xff]
    %v253 = vld [vmem:[#allocation2 + $0x5c0] sm:$0xff]
    %v254 = vld [vmem:[#allocation2 + $0x5c8] sm:$0xff]
    %v255 = vld [vmem:[#allocation2 + $0x5d0] sm:$0xff]
    %v256 = vld [vmem:[#allocation2 + $0x5d8] sm:$0xff]
    %v257 = vld [vmem:[#allocation2 + $0x5e0] sm:$0xff]
    %v258 = vld [vmem:[#allocation2 + $0x5e8] sm:$0xff]
    %v259 = vld [vmem:[#allocation2 + $0x5f0] sm:$0xff]
    %v260 = vld [vmem:[#allocation2 + $0x5f8] sm:$0xff]
    %v261 = vld [vmem:[#allocation2 + $0x600] sm:$0xff]
    %v262 = vld [vmem:[#allocation2 + $0x608] sm:$0xff]
    %v263 = vld [vmem:[#allocation2 + $0x610] sm:$0xff]
    %v264 = vld [vmem:[#allocation2 + $0x618] sm:$0xff]
    %v265 = vld [vmem:[%s2] sm:$0xf]
    %v267 = vlaneseq
    %v268 = vshrl.u32 %v267, 7
    %v269 = vsub.s32 0, %v268
    %v270 = vrot.slane %v265, %v269
    %v271 = vlaneseq
    %v272 = vshrl.u32 %v271, 7
    %v273 = vsub.s32 1, %v272
    %v274 = vrot.slane %v265, %v273
    %v275 = vlaneseq
    %v276 = vshrl.u32 %v275, 7
    %v277 = vsub.s32 2, %v276
    %v278 = vrot.slane %v265, %v277
    %v279 = vlaneseq
    %v280 = vshrl.u32 %v279, 7
    %v281 = vsub.s32 3, %v280
    %v282 = vrot.slane %v265, %v281
    %v483 = vunpack.c.l.b16 %v69
    %v484 = vunpack.c.h.b16 %v69
    %v485 = vunpack.c.l.b16 %v70
    %v486 = vunpack.c.h.b16 %v70
    %v487 = vunpack.c.l.b16 %v71
    %v488 = vunpack.c.h.b16 %v71
    %v489 = vunpack.c.l.b16 %v72
    %v490 = vunpack.c.h.b16 %v72
    %v491 = vunpack.c.l.b16 %v73
    %v492 = vunpack.c.h.b16 %v73
    %v493 = vunpack.c.l.b16 %v74
    %v494 = vunpack.c.h.b16 %v74
    %v495 = vunpack.c.l.b16 %v75
    %v496 = vunpack.c.h.b16 %v75
    %v497 = vunpack.c.l.b16 %v76
    %v498 = vunpack.c.h.b16 %v76
    %v499 = vunpack.c.l.b16 %v77
    %v500 = vunpack.c.h.b16 %v77
    %v501 = vunpack.c.l.b16 %v78
    %v502 = vunpack.c.h.b16 %v78
    %v503 = vunpack.c.l.b16 %v79
    %v504 = vunpack.c.h.b16 %v79
    %v505 = vunpack.c.l.b16 %v80
    %v506 = vunpack.c.h.b16 %v80
    %v507 = vunpack.c.l.b16 %v81
    %v508 = vunpack.c.h.b16 %v81
    %v509 = vunpack.c.l.b16 %v82
    %v510 = vunpack.c.h.b16 %v82
    %v511 = vunpack.c.l.b16 %v83
    %v512 = vunpack.c.h.b16 %v83
    %v513 = vunpack.c.l.b16 %v84
    %v514 = vunpack.c.h.b16 %v84
    %v515 = vunpack.c.l.b16 %v85
    %v516 = vunpack.c.h.b16 %v85
    %v517 = vunpack.c.l.b16 %v86
    %v518 = vunpack.c.h.b16 %v86
    %v519 = vunpack.c.l.b16 %v87
    %v520 = vunpack.c.h.b16 %v87
    %v521 = vunpack.c.l.b16 %v88
    %v522 = vunpack.c.h.b16 %v88
    %v523 = vunpack.c.l.b16 %v89
    %v524 = vunpack.c.h.b16 %v89
    %v525 = vunpack.c.l.b16 %v90
    %v526 = vunpack.c.h.b16 %v90
    %v527 = vunpack.c.l.b16 %v91
    %v528 = vunpack.c.h.b16 %v91
    %v529 = vunpack.c.l.b16 %v92
    %v530 = vunpack.c.h.b16 %v92
    %v531 = vunpack.c.l.b16 %v93
    %v532 = vunpack.c.h.b16 %v93
    %v533 = vunpack.c.l.b16 %v94
    %v534 = vunpack.c.h.b16 %v94
    %v535 = vunpack.c.l.b16 %v95
    %v536 = vunpack.c.h.b16 %v95
    %v537 = vunpack.c.l.b16 %v96
    %v538 = vunpack.c.h.b16 %v96
    %v539 = vunpack.c.l.b16 %v97
    %v540 = vunpack.c.h.b16 %v97
    %v541 = vunpack.c.l.b16 %v98
    %v542 = vunpack.c.h.b16 %v98
    %v543 = vunpack.c.l.b16 %v99
    %v544 = vunpack.c.h.b16 %v99
    %v545 = vunpack.c.l.b16 %v100
    %v546 = vunpack.c.h.b16 %v100
    %v547 = vunpack.c.l.b16 %v101
    %v548 = vunpack.c.h.b16 %v101
    %v549 = vunpack.c.l.b16 %v102
    %v550 = vunpack.c.h.b16 %v102
    %v551 = vunpack.c.l.b16 %v103
    %v552 = vunpack.c.h.b16 %v103
    %v553 = vunpack.c.l.b16 %v104
    %v554 = vunpack.c.h.b16 %v104
    %v555 = vunpack.c.l.b16 %v105
    %v556 = vunpack.c.h.b16 %v105
    %v557 = vunpack.c.l.b16 %v106
    %v558 = vunpack.c.h.b16 %v106
    %v559 = vunpack.c.l.b16 %v107
    %v560 = vunpack.c.h.b16 %v107
    %v561 = vunpack.c.l.b16 %v108
    %v562 = vunpack.c.h.b16 %v108
    %v563 = vunpack.c.l.b16 %v109
    %v564 = vunpack.c.h.b16 %v109
    %v565 = vunpack.c.l.b16 %v110
    %v566 = vunpack.c.h.b16 %v110
    %v567 = vunpack.c.l.b16 %v111
    %v568 = vunpack.c.h.b16 %v111
    %v569 = vunpack.c.l.b16 %v112
    %v570 = vunpack.c.h.b16 %v112
    %v571 = vunpack.c.l.b16 %v113
    %v572 = vunpack.c.h.b16 %v113
    %v573 = vunpack.c.l.b16 %v114
    %v574 = vunpack.c.h.b16 %v114
    %v575 = vunpack.c.l.b16 %v115
    %v576 = vunpack.c.h.b16 %v115
    %v577 = vunpack.c.l.b16 %v116
    %v578 = vunpack.c.h.b16 %v116
    %v579 = vunpack.c.l.b16 %v117
    %v580 = vunpack.c.h.b16 %v117
    %v581 = vunpack.c.l.b16 %v118
    %v582 = vunpack.c.h.b16 %v118
    %v583 = vunpack.c.l.b16 %v119
    %v584 = vunpack.c.h.b16 %v119
    %v585 = vunpack.c.l.b16 %v120
    %v586 = vunpack.c.h.b16 %v120
    %v587 = vunpack.c.l.b16 %v121
    %v588 = vunpack.c.h.b16 %v121
    %v589 = vunpack.c.l.b16 %v122
    %v590 = vunpack.c.h.b16 %v122
    %v591 = vunpack.c.l.b16 %v123
    %v592 = vunpack.c.h.b16 %v123
    %v593 = vunpack.c.l.b16 %v124
    %v594 = vunpack.c.h.b16 %v124
    %v595 = vunpack.c.l.b16 %v125
    %v596 = vunpack.c.h.b16 %v125
    %v597 = vunpack.c.l.b16 %v126
    %v598 = vunpack.c.h.b16 %v126
    %v599 = vunpack.c.l.b16 %v127
    %v600 = vunpack.c.h.b16 %v127
    %v601 = vunpack.c.l.b16 %v128
    %v602 = vunpack.c.h.b16 %v128
    %v603 = vunpack.c.l.b16 %v129
    %v604 = vunpack.c.h.b16 %v129
    %v605 = vunpack.c.l.b16 %v130
    %v606 = vunpack.c.h.b16 %v130
    %v607 = vunpack.c.l.b16 %v131
    %v608 = vunpack.c.h.b16 %v131
    %v609 = vunpack.c.l.b16 %v132
    %v610 = vunpack.c.h.b16 %v132
    %v611 = vunpack.c.l.b16 %v133
    %v612 = vunpack.c.h.b16 %v133
    %v613 = vunpack.c.l.b16 %v134
    %v614 = vunpack.c.h.b16 %v134
    %v615 = vunpack.c.l.b16 %v135
    %v616 = vunpack.c.h.b16 %v135
    %v617 = vunpack.c.l.b16 %v136
    %v618 = vunpack.c.h.b16 %v136
    %v619 = vunpack.c.l.b16 %v137
    %v620 = vunpack.c.h.b16 %v137
    %v621 = vunpack.c.l.b16 %v138
    %v622 = vunpack.c.h.b16 %v138
    %v623 = vunpack.c.l.b16 %v139
    %v624 = vunpack.c.h.b16 %v139
    %v625 = vunpack.c.l.b16 %v140
    %v626 = vunpack.c.h.b16 %v140
    %v627 = vunpack.c.l.b16 %v141
    %v628 = vunpack.c.h.b16 %v141
    %v629 = vunpack.c.l.b16 %v142
    %v630 = vunpack.c.h.b16 %v142
    %v631 = vunpack.c.l.b16 %v143
    %v632 = vunpack.c.h.b16 %v143
    %v633 = vunpack.c.l.b16 %v144
    %v634 = vunpack.c.h.b16 %v144
    %v635 = vunpack.c.l.b16 %v145
    %v636 = vunpack.c.h.b16 %v145
    %v637 = vunpack.c.l.b16 %v146
    %v638 = vunpack.c.h.b16 %v146
    %v639 = vunpack.c.l.b16 %v147
    %v640 = vunpack.c.h.b16 %v147
    %v641 = vunpack.c.l.b16 %v148
    %v642 = vunpack.c.h.b16 %v148
    %v643 = vunpack.c.l.b16 %v149
    %v644 = vunpack.c.h.b16 %v149
    %v645 = vunpack.c.l.b16 %v150
    %v646 = vunpack.c.h.b16 %v150
    %v647 = vunpack.c.l.b16 %v151
    %v648 = vunpack.c.h.b16 %v151
    %v649 = vunpack.c.l.b16 %v152
    %v650 = vunpack.c.h.b16 %v152
    %v651 = vunpack.c.l.b16 %v153
    %v652 = vunpack.c.h.b16 %v153
    %v653 = vunpack.c.l.b16 %v154
    %v654 = vunpack.c.h.b16 %v154
    %v655 = vunpack.c.l.b16 %v155
    %v656 = vunpack.c.h.b16 %v155
    %v657 = vunpack.c.l.b16 %v156
    %v658 = vunpack.c.h.b16 %v156
    %v659 = vunpack.c.l.b16 %v157
    %v660 = vunpack.c.h.b16 %v157
    %v661 = vunpack.c.l.b16 %v158
    %v662 = vunpack.c.h.b16 %v158
    %v663 = vunpack.c.l.b16 %v159
    %v664 = vunpack.c.h.b16 %v159
    %v665 = vunpack.c.l.b16 %v160
    %v666 = vunpack.c.h.b16 %v160
    %v667 = vunpack.c.l.b16 %v161
    %v668 = vunpack.c.h.b16 %v161
    %v669 = vunpack.c.l.b16 %v162
    %v670 = vunpack.c.h.b16 %v162
    %v671 = vunpack.c.l.b16 %v163
    %v672 = vunpack.c.h.b16 %v163
    %v673 = vunpack.c.l.b16 %v164
    %v674 = vunpack.c.h.b16 %v164
    %v675 = vunpack.c.l.b16 %v165
    %v676 = vunpack.c.h.b16 %v165
    %v677 = vunpack.c.l.b16 %v166
    %v678 = vunpack.c.h.b16 %v166
    %v679 = vunpack.c.l.b16 %v167
    %v680 = vunpack.c.h.b16 %v167
    %v681 = vunpack.c.l.b16 %v168
    %v682 = vunpack.c.h.b16 %v168
    %v683 = vunpack.c.l.b16 %v169
    %v684 = vunpack.c.h.b16 %v169
    %v685 = vunpack.c.l.b16 %v170
    %v686 = vunpack.c.h.b16 %v170
    %v687 = vunpack.c.l.b16 %v171
    %v688 = vunpack.c.h.b16 %v171
    %v689 = vunpack.c.l.b16 %v172
    %v690 = vunpack.c.h.b16 %v172
    %v691 = vunpack.c.l.b16 %v173
    %v692 = vunpack.c.h.b16 %v173
    %v693 = vunpack.c.l.b16 %v174
    %v694 = vunpack.c.h.b16 %v174
    %v695 = vunpack.c.l.b16 %v175
    %v696 = vunpack.c.h.b16 %v175
    %v697 = vunpack.c.l.b16 %v176
    %v698 = vunpack.c.h.b16 %v176
    %v699 = vunpack.c.l.b16 %v177
    %v700 = vunpack.c.h.b16 %v177
    %v701 = vunpack.c.l.b16 %v178
    %v702 = vunpack.c.h.b16 %v178
    %v703 = vunpack.c.l.b16 %v179
    %v704 = vunpack.c.h.b16 %v179
    %v705 = vunpack.c.l.b16 %v180
    %v706 = vunpack.c.h.b16 %v180
    %v707 = vunpack.c.l.b16 %v181
    %v708 = vunpack.c.h.b16 %v181
    %v709 = vunpack.c.l.b16 %v182
    %v710 = vunpack.c.h.b16 %v182
    %v711 = vunpack.c.l.b16 %v183
    %v712 = vunpack.c.h.b16 %v183
    %v713 = vunpack.c.l.b16 %v184
    %v714 = vunpack.c.h.b16 %v184
    %v715 = vunpack.c.l.b16 %v185
    %v716 = vunpack.c.h.b16 %v185
    %v717 = vunpack.c.l.b16 %v186
    %v718 = vunpack.c.h.b16 %v186
    %v719 = vunpack.c.l.b16 %v187
    %v720 = vunpack.c.h.b16 %v187
    %v721 = vunpack.c.l.b16 %v188
    %v722 = vunpack.c.h.b16 %v188
    %v723 = vunpack.c.l.b16 %v189
    %v724 = vunpack.c.h.b16 %v189
    %v725 = vunpack.c.l.b16 %v190
    %v726 = vunpack.c.h.b16 %v190
    %v727 = vunpack.c.l.b16 %v191
    %v728 = vunpack.c.h.b16 %v191
    %v729 = vunpack.c.l.b16 %v192
    %v730 = vunpack.c.h.b16 %v192
    %v731 = vunpack.c.l.b16 %v193
    %v732 = vunpack.c.h.b16 %v193
    %v733 = vunpack.c.l.b16 %v194
    %v734 = vunpack.c.h.b16 %v194
    %v735 = vunpack.c.l.b16 %v195
    %v736 = vunpack.c.h.b16 %v195
    %v737 = vunpack.c.l.b16 %v196
    %v738 = vunpack.c.h.b16 %v196
    %v739 = vunpack.c.l.b16 %v197
    %v740 = vunpack.c.h.b16 %v197
    %v741 = vunpack.c.l.b16 %v198
    %v742 = vunpack.c.h.b16 %v198
    %v743 = vunpack.c.l.b16 %v199
    %v744 = vunpack.c.h.b16 %v199
    %v745 = vunpack.c.l.b16 %v200
    %v746 = vunpack.c.h.b16 %v200
    %v747 = vunpack.c.l.b16 %v201
    %v748 = vunpack.c.h.b16 %v201
    %v749 = vunpack.c.l.b16 %v202
    %v750 = vunpack.c.h.b16 %v202
    %v751 = vunpack.c.l.b16 %v203
    %v752 = vunpack.c.h.b16 %v203
    %v753 = vunpack.c.l.b16 %v204
    %v754 = vunpack.c.h.b16 %v204
    %v755 = vunpack.c.l.b16 %v205
    %v756 = vunpack.c.h.b16 %v205
    %v757 = vunpack.c.l.b16 %v206
    %v758 = vunpack.c.h.b16 %v206
    %v759 = vunpack.c.l.b16 %v207
    %v760 = vunpack.c.h.b16 %v207
    %v761 = vunpack.c.l.b16 %v208
    %v762 = vunpack.c.h.b16 %v208
    %v763 = vunpack.c.l.b16 %v209
    %v764 = vunpack.c.h.b16 %v209
    %v765 = vunpack.c.l.b16 %v210
    %v766 = vunpack.c.h.b16 %v210
    %v767 = vunpack.c.l.b16 %v211
    %v768 = vunpack.c.h.b16 %v211
    %v769 = vunpack.c.l.b16 %v212
    %v770 = vunpack.c.h.b16 %v212
    %v771 = vunpack.c.l.b16 %v213
    %v772 = vunpack.c.h.b16 %v213
    %v773 = vunpack.c.l.b16 %v214
    %v774 = vunpack.c.h.b16 %v214
    %v775 = vunpack.c.l.b16 %v215
    %v776 = vunpack.c.h.b16 %v215
    %v777 = vunpack.c.l.b16 %v216
    %v778 = vunpack.c.h.b16 %v216
    %v779 = vunpack.c.l.b16 %v217
    %v780 = vunpack.c.h.b16 %v217
    %v781 = vunpack.c.l.b16 %v218
    %v782 = vunpack.c.h.b16 %v218
    %v783 = vunpack.c.l.b16 %v219
    %v784 = vunpack.c.h.b16 %v219
    %v785 = vunpack.c.l.b16 %v220
    %v786 = vunpack.c.h.b16 %v220
    %v787 = vunpack.c.l.b16 %v221
    %v788 = vunpack.c.h.b16 %v221
    %v789 = vunpack.c.l.b16 %v222
    %v790 = vunpack.c.h.b16 %v222
    %v791 = vunpack.c.l.b16 %v223
    %v792 = vunpack.c.h.b16 %v223
    %v793 = vunpack.c.l.b16 %v224
    %v794 = vunpack.c.h.b16 %v224
    %v795 = vunpack.c.l.b16 %v225
    %v796 = vunpack.c.h.b16 %v225
    %v797 = vunpack.c.l.b16 %v226
    %v798 = vunpack.c.h.b16 %v226
    %v799 = vunpack.c.l.b16 %v227
    %v800 = vunpack.c.h.b16 %v227
    %v801 = vunpack.c.l.b16 %v228
    %v802 = vunpack.c.h.b16 %v228
    %v803 = vunpack.c.l.b16 %v229
    %v804 = vunpack.c.h.b16 %v229
    %v805 = vunpack.c.l.b16 %v230
    %v806 = vunpack.c.h.b16 %v230
    %v807 = vunpack.c.l.b16 %v231
    %v808 = vunpack.c.h.b16 %v231
    %v809 = vunpack.c.l.b16 %v232
    %v810 = vunpack.c.h.b16 %v232
    %v811 = vunpack.c.l.b16 %v233
    %v812 = vunpack.c.h.b16 %v233
    %v813 = vunpack.c.l.b16 %v234
    %v814 = vunpack.c.h.b16 %v234
    %v815 = vunpack.c.l.b16 %v235
    %v816 = vunpack.c.h.b16 %v235
    %v817 = vunpack.c.l.b16 %v236
    %v818 = vunpack.c.h.b16 %v236
    %v819 = vunpack.c.l.b16 %v237
    %v820 = vunpack.c.h.b16 %v237
    %v821 = vunpack.c.l.b16 %v238
    %v822 = vunpack.c.h.b16 %v238
    %v823 = vunpack.c.l.b16 %v239
    %v824 = vunpack.c.h.b16 %v239
    %v825 = vunpack.c.l.b16 %v240
    %v826 = vunpack.c.h.b16 %v240
    %v827 = vunpack.c.l.b16 %v241
    %v828 = vunpack.c.h.b16 %v241
    %v829 = vunpack.c.l.b16 %v242
    %v830 = vunpack.c.h.b16 %v242
    %v831 = vunpack.c.l.b16 %v243
    %v832 = vunpack.c.h.b16 %v243
    %v833 = vunpack.c.l.b16 %v244
    %v834 = vunpack.c.h.b16 %v244
    %v835 = vunpack.c.l.b16 %v245
    %v836 = vunpack.c.h.b16 %v245
    %v837 = vunpack.c.l.b16 %v246
    %v838 = vunpack.c.h.b16 %v246
    %v839 = vunpack.c.l.b16 %v247
    %v840 = vunpack.c.h.b16 %v247
    %v841 = vunpack.c.l.b16 %v248
    %v842 = vunpack.c.h.b16 %v248
    %v843 = vunpack.c.l.b16 %v249
    %v844 = vunpack.c.h.b16 %v249
    %v845 = vunpack.c.l.b16 %v250
    %v846 = vunpack.c.h.b16 %v250
    %v847 = vunpack.c.l.b16 %v251
    %v848 = vunpack.c.h.b16 %v251
    %v849 = vunpack.c.l.b16 %v252
    %v850 = vunpack.c.h.b16 %v252
    %v851 = vunpack.c.l.b16 %v253
    %v852 = vunpack.c.h.b16 %v253
    %v853 = vunpack.c.l.b16 %v254
    %v854 = vunpack.c.h.b16 %v254
    %v855 = vunpack.c.l.b16 %v255
    %v856 = vunpack.c.h.b16 %v255
    %v857 = vunpack.c.l.b16 %v256
    %v858 = vunpack.c.h.b16 %v256
    %v859 = vunpack.c.l.b16 %v257
    %v860 = vunpack.c.h.b16 %v257
    %v861 = vunpack.c.l.b16 %v258
    %v862 = vunpack.c.h.b16 %v258
    %v863 = vunpack.c.l.b16 %v259
    %v864 = vunpack.c.h.b16 %v259
    %v865 = vunpack.c.l.b16 %v260
    %v866 = vunpack.c.h.b16 %v260
    %v867 = vunpack.c.l.b16 %v261
    %v868 = vunpack.c.h.b16 %v261
    %v869 = vunpack.c.l.b16 %v262
    %v870 = vunpack.c.h.b16 %v262
    %v871 = vunpack.c.l.b16 %v263
    %v872 = vunpack.c.h.b16 %v263
    %v873 = vunpack.c.l.b16 %v264
    %v874 = vunpack.c.h.b16 %v264
    %v875 = vpack.c.b16 %v487, %v483
    %v876 = vpack.c.b16 %v488, %v484
    %v877 = vpack.c.b16 %v489, %v485
    %v878 = vpack.c.b16 %v490, %v486
    %v879 = vpack.c.b16 %v495, %v491
    %v880 = vpack.c.b16 %v496, %v492
    %v881 = vpack.c.b16 %v497, %v493
    %v882 = vpack.c.b16 %v498, %v494
    %v883 = vpack.c.b16 %v503, %v499
    %v884 = vpack.c.b16 %v504, %v500
    %v885 = vpack.c.b16 %v505, %v501
    %v886 = vpack.c.b16 %v506, %v502
    %v887 = vpack.c.b16 %v511, %v507
    %v888 = vpack.c.b16 %v512, %v508
    %v889 = vpack.c.b16 %v513, %v509
    %v890 = vpack.c.b16 %v514, %v510
    %v891 = vpack.c.b16 %v519, %v515
    %v892 = vpack.c.b16 %v520, %v516
    %v893 = vpack.c.b16 %v521, %v517
    %v894 = vpack.c.b16 %v522, %v518
    %v895 = vpack.c.b16 %v527, %v523
    %v896 = vpack.c.b16 %v528, %v524
    %v897 = vpack.c.b16 %v529, %v525
    %v898 = vpack.c.b16 %v530, %v526
    %v899 = vpack.c.b16 %v535, %v531
    %v900 = vpack.c.b16 %v536, %v532
    %v901 = vpack.c.b16 %v537, %v533
    %v902 = vpack.c.b16 %v538, %v534
    %v903 = vpack.c.b16 %v543, %v539
    %v904 = vpack.c.b16 %v544, %v540
    %v905 = vpack.c.b16 %v545, %v541
    %v906 = vpack.c.b16 %v546, %v542
    %v907 = vpack.c.b16 %v551, %v547
    %v908 = vpack.c.b16 %v552, %v548
    %v909 = vpack.c.b16 %v553, %v549
    %v910 = vpack.c.b16 %v554, %v550
    %v911 = vpack.c.b16 %v559, %v555
    %v912 = vpack.c.b16 %v560, %v556
    %v913 = vpack.c.b16 %v561, %v557
    %v914 = vpack.c.b16 %v562, %v558
    %v915 = vpack.c.b16 %v567, %v563
    %v916 = vpack.c.b16 %v568, %v564
    %v917 = vpack.c.b16 %v569, %v565
    %v918 = vpack.c.b16 %v570, %v566
    %v919 = vpack.c.b16 %v575, %v571
    %v920 = vpack.c.b16 %v576, %v572
    %v921 = vpack.c.b16 %v577, %v573
    %v922 = vpack.c.b16 %v578, %v574
    %v923 = vpack.c.b16 %v583, %v579
    %v924 = vpack.c.b16 %v584, %v580
    %v925 = vpack.c.b16 %v585, %v581
    %v926 = vpack.c.b16 %v586, %v582
    %v927 = vpack.c.b16 %v591, %v587
    %v928 = vpack.c.b16 %v592, %v588
    %v929 = vpack.c.b16 %v593, %v589
    %v930 = vpack.c.b16 %v594, %v590
    %v931 = vpack.c.b16 %v599, %v595
    %v932 = vpack.c.b16 %v600, %v596
    %v933 = vpack.c.b16 %v601, %v597
    %v934 = vpack.c.b16 %v602, %v598
    %v935 = vpack.c.b16 %v607, %v603
    %v936 = vpack.c.b16 %v608, %v604
    %v937 = vpack.c.b16 %v609, %v605
    %v938 = vpack.c.b16 %v610, %v606
    %v939 = vpack.c.b16 %v615, %v611
    %v940 = vpack.c.b16 %v616, %v612
    %v941 = vpack.c.b16 %v617, %v613
    %v942 = vpack.c.b16 %v618, %v614
    %v943 = vpack.c.b16 %v623, %v619
    %v944 = vpack.c.b16 %v624, %v620
    %v945 = vpack.c.b16 %v625, %v621
    %v946 = vpack.c.b16 %v626, %v622
    %v947 = vpack.c.b16 %v631, %v627
    %v948 = vpack.c.b16 %v632, %v628
    %v949 = vpack.c.b16 %v633, %v629
    %v950 = vpack.c.b16 %v634, %v630
    %v951 = vpack.c.b16 %v639, %v635
    %v952 = vpack.c.b16 %v640, %v636
    %v953 = vpack.c.b16 %v641, %v637
    %v954 = vpack.c.b16 %v642, %v638
    %v955 = vpack.c.b16 %v647, %v643
    %v956 = vpack.c.b16 %v648, %v644
    %v957 = vpack.c.b16 %v649, %v645
    %v958 = vpack.c.b16 %v650, %v646
    %v959 = vpack.c.b16 %v655, %v651
    %v960 = vpack.c.b16 %v656, %v652
    %v961 = vpack.c.b16 %v657, %v653
    %v962 = vpack.c.b16 %v658, %v654
    %v963 = vpack.c.b16 %v663, %v659
    %v964 = vpack.c.b16 %v664, %v660
    %v965 = vpack.c.b16 %v665, %v661
    %v966 = vpack.c.b16 %v666, %v662
    %v967 = vpack.c.b16 %v671, %v667
    %v968 = vpack.c.b16 %v672, %v668
    %v969 = vpack.c.b16 %v673, %v669
    %v970 = vpack.c.b16 %v674, %v670
    %v971 = vpack.c.b16 %v679, %v675
    %v972 = vpack.c.b16 %v680, %v676
    %v973 = vpack.c.b16 %v681, %v677
    %v974 = vpack.c.b16 %v682, %v678
    %v975 = vpack.c.b16 %v687, %v683
    %v976 = vpack.c.b16 %v688, %v684
    %v977 = vpack.c.b16 %v689, %v685
    %v978 = vpack.c.b16 %v690, %v686
    %v979 = vpack.c.b16 %v695, %v691
    %v980 = vpack.c.b16 %v696, %v692
    %v981 = vpack.c.b16 %v697, %v693
    %v982 = vpack.c.b16 %v698, %v694
    %v983 = vpack.c.b16 %v703, %v699
    %v984 = vpack.c.b16 %v704, %v700
    %v985 = vpack.c.b16 %v705, %v701
    %v986 = vpack.c.b16 %v706, %v702
    %v987 = vpack.c.b16 %v711, %v707
    %v988 = vpack.c.b16 %v712, %v708
    %v989 = vpack.c.b16 %v713, %v709
    %v990 = vpack.c.b16 %v714, %v710
    %v991 = vpack.c.b16 %v719, %v715
    %v992 = vpack.c.b16 %v720, %v716
    %v993 = vpack.c.b16 %v721, %v717
    %v994 = vpack.c.b16 %v722, %v718
    %v995 = vpack.c.b16 %v727, %v723
    %v996 = vpack.c.b16 %v728, %v724
    %v997 = vpack.c.b16 %v729, %v725
    %v998 = vpack.c.b16 %v730, %v726
    %v999 = vpack.c.b16 %v735, %v731
    %v1000 = vpack.c.b16 %v736, %v732
    %v1001 = vpack.c.b16 %v737, %v733
    %v1002 = vpack.c.b16 %v738, %v734
    %v1003 = vpack.c.b16 %v743, %v739
    %v1004 = vpack.c.b16 %v744, %v740
    %v1005 = vpack.c.b16 %v745, %v741
    %v1006 = vpack.c.b16 %v746, %v742
    %v1007 = vpack.c.b16 %v751, %v747
    %v1008 = vpack.c.b16 %v752, %v748
    %v1009 = vpack.c.b16 %v753, %v749
    %v1010 = vpack.c.b16 %v754, %v750
    %v1011 = vpack.c.b16 %v759, %v755
    %v1012 = vpack.c.b16 %v760, %v756
    %v1013 = vpack.c.b16 %v761, %v757
    %v1014 = vpack.c.b16 %v762, %v758
    %v1015 = vpack.c.b16 %v767, %v763
    %v1016 = vpack.c.b16 %v768, %v764
    %v1017 = vpack.c.b16 %v769, %v765
    %v1018 = vpack.c.b16 %v770, %v766
    %v1019 = vpack.c.b16 %v775, %v771
    %v1020 = vpack.c.b16 %v776, %v772
    %v1021 = vpack.c.b16 %v777, %v773
    %v1022 = vpack.c.b16 %v778, %v774
    %v1023 = vpack.c.b16 %v783, %v779
    %v1024 = vpack.c.b16 %v784, %v780
    %v1025 = vpack.c.b16 %v785, %v781
    %v1026 = vpack.c.b16 %v786, %v782
    %v1027 = vpack.c.b16 %v791, %v787
    %v1028 = vpack.c.b16 %v792, %v788
    %v1029 = vpack.c.b16 %v793, %v789
    %v1030 = vpack.c.b16 %v794, %v790
    %v1031 = vpack.c.b16 %v799, %v795
    %v1032 = vpack.c.b16 %v800, %v796
    %v1033 = vpack.c.b16 %v801, %v797
    %v1034 = vpack.c.b16 %v802, %v798
    %v1035 = vpack.c.b16 %v807, %v803
    %v1036 = vpack.c.b16 %v808, %v804
    %v1037 = vpack.c.b16 %v809, %v805
    %v1038 = vpack.c.b16 %v810, %v806
    %v1039 = vpack.c.b16 %v815, %v811
    %v1040 = vpack.c.b16 %v816, %v812
    %v1041 = vpack.c.b16 %v817, %v813
    %v1042 = vpack.c.b16 %v818, %v814
    %v1043 = vpack.c.b16 %v823, %v819
    %v1044 = vpack.c.b16 %v824, %v820
    %v1045 = vpack.c.b16 %v825, %v821
    %v1046 = vpack.c.b16 %v826, %v822
    %v1047 = vpack.c.b16 %v831, %v827
    %v1048 = vpack.c.b16 %v832, %v828
    %v1049 = vpack.c.b16 %v833, %v829
    %v1050 = vpack.c.b16 %v834, %v830
    %v1051 = vpack.c.b16 %v839, %v835
    %v1052 = vpack.c.b16 %v840, %v836
    %v1053 = vpack.c.b16 %v841, %v837
    %v1054 = vpack.c.b16 %v842, %v838
    %v1055 = vpack.c.b16 %v847, %v843
    %v1056 = vpack.c.b16 %v848, %v844
    %v1057 = vpack.c.b16 %v849, %v845
    %v1058 = vpack.c.b16 %v850, %v846
    %v1059 = vpack.c.b16 %v855, %v851
    %v1060 = vpack.c.b16 %v856, %v852
    %v1061 = vpack.c.b16 %v857, %v853
    %v1062 = vpack.c.b16 %v858, %v854
    %v1063 = vpack.c.b16 %v863, %v859
    %v1064 = vpack.c.b16 %v864, %v860
    %v1065 = vpack.c.b16 %v865, %v861
    %v1066 = vpack.c.b16 %v866, %v862
    %v1067 = vpack.c.b16 %v871, %v867
    %v1068 = vpack.c.b16 %v872, %v868
    %v1069 = vpack.c.b16 %v873, %v869
    %v1070 = vpack.c.b16 %v874, %v870
    %vm1267 = vcmask 130048
    %v1269 = vsel %vm1267, %v68, 0
    %1271 = vmatprep.subr.bf16.mxu0 %v876
    %1272 = vmatpush1.bf16.msra.mxu0 %v875
    %1273 = vmatprep.subr.bf16.mxu0 %v880
    %1274 = vmatpush1.bf16.msra.mxu0 %v879
    %1275 = vmatprep.subr.bf16.mxu0 %v884
    %1276 = vmatpush1.bf16.msra.mxu0 %v883
    %1277 = vmatprep.subr.bf16.mxu0 %v888
    %1278 = vmatpush1.bf16.msra.mxu0 %v887
    %1279 = vmatprep.subr.bf16.mxu0 %v892
    %1280 = vmatpush1.bf16.msra.mxu0 %v891
    %1281 = vmatprep.subr.bf16.mxu0 %v896
    %1282 = vmatpush1.bf16.msra.mxu0 %v895
    %1283 = vmatprep.subr.bf16.mxu0 %v900
    %1284 = vmatpush1.bf16.msra.mxu0 %v899
    %1285 = vmatprep.subr.bf16.mxu0 %v904
    %1286 = vmatpush1.bf16.msra.mxu0 %v903
    %1287 = vmatprep.subr.bf16.mxu0 %v908
    %1288 = vmatpush1.bf16.msra.mxu0 %v907
    %1289 = vmatprep.subr.bf16.mxu0 %v912
    %1290 = vmatpush1.bf16.msra.mxu0 %v911
    %1291 = vmatprep.subr.bf16.mxu0 %v916
    %1292 = vmatpush1.bf16.msra.mxu0 %v915
    %1293 = vmatprep.subr.bf16.mxu0 %v920
    %1294 = vmatpush1.bf16.msra.mxu0 %v919
    %1295 = vmatprep.subr.bf16.mxu0 %v924
    %1296 = vmatpush1.bf16.msra.mxu0 %v923
    %1297 = vmatprep.subr.bf16.mxu0 %v928
    %1298 = vmatpush1.bf16.msra.mxu0 %v927
    %1299 = vmatprep.subr.bf16.mxu0 %v932
    %1300 = vmatpush1.bf16.msra.mxu0 %v931
    %1301 = vmatprep.subr.bf16.mxu0 %v936
    %1302 = vmatpush1.bf16.msra.mxu0 %v935
    %1303 = vmatprep.mubr.bf16.mxu0 %v63
    %1304 = vmatmul.mubr.bf16.gmra.mrb[0].mxu0 %v62
    %v1305 = vpop.f32.mrb[0].mxu0
    %v1306 = vadd.f32 %v270, %v1305
    %v1307 = vpop.f32.mrb[0].mxu0
    %v1308 = vadd.f32 %v274, %v1307
    %v1309 = vpop.f32.mrb[0].mxu0
    %v1310 = vpop.f32.mrb[0].mxu0
    %1311 = vdwg.mxu0
    %1312 = vmatprep.subr.bf16.mxu0 %v940
    %1313 = vmatpush1.bf16.msra.mxu0 %v939
    %1314 = vmatprep.subr.bf16.mxu0 %v944
    %1315 = vmatpush1.bf16.msra.mxu0 %v943
    %1316 = vmatprep.subr.bf16.mxu0 %v948
    %1317 = vmatpush1.bf16.msra.mxu0 %v947
    %1318 = vmatprep.subr.bf16.mxu0 %v952
    %1319 = vmatpush1.bf16.msra.mxu0 %v951
    %1320 = vmatprep.subr.bf16.mxu0 %v956
    %1321 = vmatpush1.bf16.msra.mxu0 %v955
    %1322 = vmatprep.subr.bf16.mxu0 %v960
    %1323 = vmatpush1.bf16.msra.mxu0 %v959
    %1324 = vmatprep.subr.bf16.mxu0 %v964
    %1325 = vmatpush1.bf16.msra.mxu0 %v963
    %1326 = vmatprep.subr.bf16.mxu0 %v968
    %1327 = vmatpush1.bf16.msra.mxu0 %v967
    %1328 = vmatprep.subr.bf16.mxu0 %v972
    %1329 = vmatpush1.bf16.msra.mxu0 %v971
    %1330 = vmatprep.subr.bf16.mxu0 %v976
    %1331 = vmatpush1.bf16.msra.mxu0 %v975
    %1332 = vmatprep.subr.bf16.mxu0 %v980
    %1333 = vmatpush1.bf16.msra.mxu0 %v979
    %1334 = vmatprep.subr.bf16.mxu0 %v984
    %1335 = vmatpush1.bf16.msra.mxu0 %v983
    %1336 = vmatprep.subr.bf16.mxu0 %v988
    %1337 = vmatpush1.bf16.msra.mxu0 %v987
    %1338 = vmatprep.subr.bf16.mxu0 %v992
    %1339 = vmatpush1.bf16.msra.mxu0 %v991
    %1340 = vmatprep.subr.bf16.mxu0 %v996
    %1341 = vmatpush1.bf16.msra.mxu0 %v995
    %1342 = vmatprep.subr.bf16.mxu0 %v1000
    %1343 = vmatpush1.bf16.msra.mxu0 %v999
    %1344 = vmatprep.mubr.bf16.mxu0 %v65
    %1345 = vmatmul.mubr.bf16.gmra.mrb[0].mxu0 %v64
    %v1346 = vpop.f32.mrb[0].mxu0
    %v1347 = vadd.f32 %v1306, %v1346
    %v1348 = vpop.f32.mrb[0].mxu0
    %v1349 = vadd.f32 %v1308, %v1348
    %v1350 = vpop.f32.mrb[0].mxu0
    %v1351 = vpop.f32.mrb[0].mxu0
    %1352 = vdwg.mxu0
    %1353 = vmatprep.subr.bf16.mxu0 %v1004
    %1354 = vmatpush1.bf16.msra.mxu0 %v1003
    %1355 = vmatprep.subr.bf16.mxu0 %v1008
    %1356 = vmatpush1.bf16.msra.mxu0 %v1007
    %1357 = vmatprep.subr.bf16.mxu0 %v1012
    %1358 = vmatpush1.bf16.msra.mxu0 %v1011
    %1359 = vmatprep.subr.bf16.mxu0 %v1016
    %1360 = vmatpush1.bf16.msra.mxu0 %v1015
    %1361 = vmatprep.subr.bf16.mxu0 %v1020
    %1362 = vmatpush1.bf16.msra.mxu0 %v1019
    %1363 = vmatprep.subr.bf16.mxu0 %v1024
    %1364 = vmatpush1.bf16.msra.mxu0 %v1023
    %1365 = vmatprep.subr.bf16.mxu0 %v1028
    %1366 = vmatpush1.bf16.msra.mxu0 %v1027
    %1367 = vmatprep.subr.bf16.mxu0 %v1032
    %1368 = vmatpush1.bf16.msra.mxu0 %v1031
    %1369 = vmatprep.subr.bf16.mxu0 %v1036
    %1370 = vmatpush1.bf16.msra.mxu0 %v1035
    %1371 = vmatprep.subr.bf16.mxu0 %v1040
    %1372 = vmatpush1.bf16.msra.mxu0 %v1039
    %1373 = vmatprep.subr.bf16.mxu0 %v1044
    %1374 = vmatpush1.bf16.msra.mxu0 %v1043
    %1375 = vmatprep.subr.bf16.mxu0 %v1048
    %1376 = vmatpush1.bf16.msra.mxu0 %v1047
    %1377 = vmatprep.subr.bf16.mxu0 %v1052
    %1378 = vmatpush1.bf16.msra.mxu0 %v1051
    %1379 = vmatprep.subr.bf16.mxu0 %v1056
    %1380 = vmatpush1.bf16.msra.mxu0 %v1055
    %1381 = vmatprep.subr.bf16.mxu0 %v1060
    %1382 = vmatpush1.bf16.msra.mxu0 %v1059
    %1383 = vmatprep.subr.bf16.mxu0 %v1064
    %1384 = vmatpush1.bf16.msra.mxu0 %v1063
    %1385 = vmatprep.mubr.bf16.mxu0 %v67
    %1386 = vmatmul.mubr.bf16.gmra.mrb[0].mxu0 %v66
    %v1387 = vpop.f32.mrb[0].mxu0
    %v1388 = vadd.f32 %v1347, %v1387
    %v1389 = vpop.f32.mrb[0].mxu0
    %v1390 = vadd.f32 %v1349, %v1389
    %v1391 = vpop.f32.mrb[0].mxu0
    %v1392 = vpop.f32.mrb[0].mxu0
    %1393 = vdwg.mxu0
    %1394 = vmatprep.subr.bf16.mxu0 %v1068
    %1395 = vmatpush1.bf16.msra.mxu0 %v1067
    %1396 = vmatprep.subr.bf16.mxu0 0
    %1397 = vmatpush1.bf16.msra.mxu0 0
    %1398 = vmatprep.subr.bf16.mxu0 0
    %1399 = vmatpush1.bf16.msra.mxu0 0
    %1400 = vmatprep.subr.bf16.mxu0 0
    %1401 = vmatpush1.bf16.msra.mxu0 0
    %1402 = vmatprep.subr.bf16.mxu0 0
    %1403 = vmatpush1.bf16.msra.mxu0 0
    %1404 = vmatprep.subr.bf16.mxu0 0
    %1405 = vmatpush1.bf16.msra.mxu0 0
    %1406 = vmatprep.subr.bf16.mxu0 0
    %1407 = vmatpush1.bf16.msra.mxu0 0
    %1408 = vmatprep.subr.bf16.mxu0 0
    %1409 = vmatpush1.bf16.msra.mxu0 0
    %1410 = vmatprep.subr.bf16.mxu0 0
    %1411 = vmatpush1.bf16.msra.mxu0 0
    %1412 = vmatprep.subr.bf16.mxu0 0
    %1413 = vmatpush1.bf16.msra.mxu0 0
    %1414 = vmatprep.subr.bf16.mxu0 0
    %1415 = vmatpush1.bf16.msra.mxu0 0
    %1416 = vmatprep.subr.bf16.mxu0 0
    %1417 = vmatpush1.bf16.msra.mxu0 0
    %1418 = vmatprep.subr.bf16.mxu0 0
    %1419 = vmatpush1.bf16.msra.mxu0 0
    %1420 = vmatprep.subr.bf16.mxu0 0
    %1421 = vmatpush1.bf16.msra.mxu0 0
    %1422 = vmatprep.subr.bf16.mxu0 0
    %1423 = vmatpush1.bf16.msra.mxu0 0
    %1424 = vmatprep.subr.bf16.mxu0 0
    %1425 = vmatpush1.bf16.msra.mxu0 0
    %1426 = vmatprep.mubr.bf16.mxu0 0
    %1427 = vmatmul.mubr.bf16.gmra.mrb[0].mxu0 %v1269
    %v1428 = vpop.f32.mrb[0].mxu0
    %v1429 = vadd.f32 %v1388, %v1428
    %v1430 = vpop.f32.mrb[0].mxu0
    %v1431 = vadd.f32 %v1390, %v1430
    %v1432 = vpop.f32.mrb[0].mxu0
    %v1433 = vpop.f32.mrb[0].mxu0
    %1434 = vdwg.mxu0
    %1435 = vmatprep.subr.bf16.mxu0 %v878
    %1436 = vmatpush1.bf16.msra.mxu0 %v877
    %1437 = vmatprep.subr.bf16.mxu0 %v882
    %1438 = vmatpush1.bf16.msra.mxu0 %v881
    %1439 = vmatprep.subr.bf16.mxu0 %v886
    %1440 = vmatpush1.bf16.msra.mxu0 %v885
    %1441 = vmatprep.subr.bf16.mxu0 %v890
    %1442 = vmatpush1.bf16.msra.mxu0 %v889
    %1443 = vmatprep.subr.bf16.mxu0 %v894
    %1444 = vmatpush1.bf16.msra.mxu0 %v893
    %1445 = vmatprep.subr.bf16.mxu0 %v898
    %1446 = vmatpush1.bf16.msra.mxu0 %v897
    %1447 = vmatprep.subr.bf16.mxu0 %v902
    %1448 = vmatpush1.bf16.msra.mxu0 %v901
    %1449 = vmatprep.subr.bf16.mxu0 %v906
    %1450 = vmatpush1.bf16.msra.mxu0 %v905
    %1451 = vmatprep.subr.bf16.mxu0 %v910
    %1452 = vmatpush1.bf16.msra.mxu0 %v909
    %1453 = vmatprep.subr.bf16.mxu0 %v914
    %1454 = vmatpush1.bf16.msra.mxu0 %v913
    %1455 = vmatprep.subr.bf16.mxu0 %v918
    %1456 = vmatpush1.bf16.msra.mxu0 %v917
    %1457 = vmatprep.subr.bf16.mxu0 %v922
    %1458 = vmatpush1.bf16.msra.mxu0 %v921
    %1459 = vmatprep.subr.bf16.mxu0 %v926
    %1460 = vmatpush1.bf16.msra.mxu0 %v925
    %1461 = vmatprep.subr.bf16.mxu0 %v930
    %1462 = vmatpush1.bf16.msra.mxu0 %v929
    %1463 = vmatprep.subr.bf16.mxu0 %v934
    %1464 = vmatpush1.bf16.msra.mxu0 %v933
    %1465 = vmatprep.subr.bf16.mxu0 %v938
    %1466 = vmatpush1.bf16.msra.mxu0 %v937
    %1467 = vmatprep.mubr.bf16.mxu0 %v63
    %1468 = vmatmul.mubr.bf16.gmra.mrb[0].mxu0 %v62
    %v1469 = vpop.f32.mrb[0].mxu0
    %v1470 = vadd.f32 %v278, %v1469
    %v1471 = vpop.f32.mrb[0].mxu0
    %v1472 = vadd.f32 %v282, %v1471
    %v1473 = vpop.f32.mrb[0].mxu0
    %v1474 = vpop.f32.mrb[0].mxu0
    %1475 = vdwg.mxu0
    %1476 = vmatprep.subr.bf16.mxu0 %v942
    %1477 = vmatpush1.bf16.msra.mxu0 %v941
    %1478 = vmatprep.subr.bf16.mxu0 %v946
    %1479 = vmatpush1.bf16.msra.mxu0 %v945
    %1480 = vmatprep.subr.bf16.mxu0 %v950
    %1481 = vmatpush1.bf16.msra.mxu0 %v949
    %1482 = vmatprep.subr.bf16.mxu0 %v954
    %1483 = vmatpush1.bf16.msra.mxu0 %v953
    %1484 = vmatprep.subr.bf16.mxu0 %v958
    %1485 = vmatpush1.bf16.msra.mxu0 %v957
    %1486 = vmatprep.subr.bf16.mxu0 %v962
    %1487 = vmatpush1.bf16.msra.mxu0 %v961
    %1488 = vmatprep.subr.bf16.mxu0 %v966
    %1489 = vmatpush1.bf16.msra.mxu0 %v965
    %1490 = vmatprep.subr.bf16.mxu0 %v970
    %1491 = vmatpush1.bf16.msra.mxu0 %v969
    %1492 = vmatprep.subr.bf16.mxu0 %v974
    %1493 = vmatpush1.bf16.msra.mxu0 %v973
    %1494 = vmatprep.subr.bf16.mxu0 %v978
    %1495 = vmatpush1.bf16.msra.mxu0 %v977
    %1496 = vmatprep.subr.bf16.mxu0 %v982
    %1497 = vmatpush1.bf16.msra.mxu0 %v981
    %1498 = vmatprep.subr.bf16.mxu0 %v986
    %1499 = vmatpush1.bf16.msra.mxu0 %v985
    %1500 = vmatprep.subr.bf16.mxu0 %v990
    %1501 = vmatpush1.bf16.msra.mxu0 %v989
    %1502 = vmatprep.subr.bf16.mxu0 %v994
    %1503 = vmatpush1.bf16.msra.mxu0 %v993
    %1504 = vmatprep.subr.bf16.mxu0 %v998
    %1505 = vmatpush1.bf16.msra.mxu0 %v997
    %1506 = vmatprep.subr.bf16.mxu0 %v1002
    %1507 = vmatpush1.bf16.msra.mxu0 %v1001
    %1508 = vmatprep.mubr.bf16.mxu0 %v65
    %1509 = vmatmul.mubr.bf16.gmra.mrb[0].mxu0 %v64
    %v1510 = vpop.f32.mrb[0].mxu0
    %v1511 = vadd.f32 %v1470, %v1510
    %v1512 = vpop.f32.mrb[0].mxu0
    %v1513 = vadd.f32 %v1472, %v1512
    %v1514 = vpop.f32.mrb[0].mxu0
    %v1515 = vpop.f32.mrb[0].mxu0
    %1516 = vdwg.mxu0
    %1517 = vmatprep.subr.bf16.mxu0 %v1006
    %1518 = vmatpush1.bf16.msra.mxu0 %v1005
    %1519 = vmatprep.subr.bf16.mxu0 %v1010
    %1520 = vmatpush1.bf16.msra.mxu0 %v1009
    %1521 = vmatprep.subr.bf16.mxu0 %v1014
    %1522 = vmatpush1.bf16.msra.mxu0 %v1013
    %1523 = vmatprep.subr.bf16.mxu0 %v1018
    %1524 = vmatpush1.bf16.msra.mxu0 %v1017
    %1525 = vmatprep.subr.bf16.mxu0 %v1022
    %1526 = vmatpush1.bf16.msra.mxu0 %v1021
    %1527 = vmatprep.subr.bf16.mxu0 %v1026
    %1528 = vmatpush1.bf16.msra.mxu0 %v1025
    %1529 = vmatprep.subr.bf16.mxu0 %v1030
    %1530 = vmatpush1.bf16.msra.mxu0 %v1029
    %1531 = vmatprep.subr.bf16.mxu0 %v1034
    %1532 = vmatpush1.bf16.msra.mxu0 %v1033
    %1533 = vmatprep.subr.bf16.mxu0 %v1038
    %1534 = vmatpush1.bf16.msra.mxu0 %v1037
    %1535 = vmatprep.subr.bf16.mxu0 %v1042
    %1536 = vmatpush1.bf16.msra.mxu0 %v1041
    %1537 = vmatprep.subr.bf16.mxu0 %v1046
    %1538 = vmatpush1.bf16.msra.mxu0 %v1045
    %1539 = vmatprep.subr.bf16.mxu0 %v1050
    %1540 = vmatpush1.bf16.msra.mxu0 %v1049
    %1541 = vmatprep.subr.bf16.mxu0 %v1054
    %1542 = vmatpush1.bf16.msra.mxu0 %v1053
    %1543 = vmatprep.subr.bf16.mxu0 %v1058
    %1544 = vmatpush1.bf16.msra.mxu0 %v1057
    %1545 = vmatprep.subr.bf16.mxu0 %v1062
    %1546 = vmatpush1.bf16.msra.mxu0 %v1061
    %1547 = vmatprep.subr.bf16.mxu0 %v1066
    %1548 = vmatpush1.bf16.msra.mxu0 %v1065
    %1549 = vmatprep.mubr.bf16.mxu0 %v67
    %1550 = vmatmul.mubr.bf16.gmra.mrb[0].mxu0 %v66
    %v1551 = vpop.f32.mrb[0].mxu0
    %v1552 = vadd.f32 %v1511, %v1551
    %v1553 = vpop.f32.mrb[0].mxu0
    %v1554 = vadd.f32 %v1513, %v1553
    %v1555 = vpop.f32.mrb[0].mxu0
    %v1556 = vpop.f32.mrb[0].mxu0
    %1557 = vdwg.mxu0
    %1558 = vmatprep.subr.bf16.mxu0 %v1070
    %1559 = vmatpush1.bf16.msra.mxu0 %v1069
    %1560 = vmatprep.subr.bf16.mxu0 0
    %1561 = vmatpush1.bf16.msra.mxu0 0
    %1562 = vmatprep.subr.bf16.mxu0 0
    %1563 = vmatpush1.bf16.msra.mxu0 0
    %1564 = vmatprep.subr.bf16.mxu0 0
    %1565 = vmatpush1.bf16.msra.mxu0 0
    %1566 = vmatprep.subr.bf16.mxu0 0
    %1567 = vmatpush1.bf16.msra.mxu0 0
    %1568 = vmatprep.subr.bf16.mxu0 0
    %1569 = vmatpush1.bf16.msra.mxu0 0
    %1570 = vmatprep.subr.bf16.mxu0 0
    %1571 = vmatpush1.bf16.msra.mxu0 0
    %1572 = vmatprep.subr.bf16.mxu0 0
    %1573 = vmatpush1.bf16.msra.mxu0 0
    %1574 = vmatprep.subr.bf16.mxu0 0
    %1575 = vmatpush1.bf16.msra.mxu0 0
    %1576 = vmatprep.subr.bf16.mxu0 0
    %1577 = vmatpush1.bf16.msra.mxu0 0
    %1578 = vmatprep.subr.bf16.mxu0 0
    %1579 = vmatpush1.bf16.msra.mxu0 0
    %1580 = vmatprep.subr.bf16.mxu0 0
    %1581 = vmatpush1.bf16.msra.mxu0 0
    %1582 = vmatprep.subr.bf16.mxu0 0
    %1583 = vmatpush1.bf16.msra.mxu0 0
    %1584 = vmatprep.subr.bf16.mxu0 0
    %1585 = vmatpush1.bf16.msra.mxu0 0
    %1586 = vmatprep.subr.bf16.mxu0 0
    %1587 = vmatpush1.bf16.msra.mxu0 0
    %1588 = vmatprep.subr.bf16.mxu0 0
    %1589 = vmatpush1.bf16.msra.mxu0 0
    %1590 = vmatprep.mubr.bf16.mxu0 0
    %1591 = vmatmul.mubr.bf16.gmra.mrb[0].mxu0 %v1269
    %v1592 = vpop.f32.mrb[0].mxu0
    %v1593 = vadd.f32 %v1552, %v1592
    %v1594 = vpop.f32.mrb[0].mxu0
    %v1595 = vadd.f32 %v1554, %v1594
    %v1596 = vpop.f32.mrb[0].mxu0
    %v1597 = vpop.f32.mrb[0].mxu0
    %1598 = vdwg.mxu0
    %v1599 = vmax.f32 %v1429, 0.0
    %v1600 = vmax.f32 %v1431, 0.0
    %v1601 = vmax.f32 %v1593, 0.0
    %v1602 = vmax.f32 %v1595, 0.0
    %v1603 = vpack.c.bf16 %v1599, %v1599
    %v1604 = vpack.c.bf16 %v1600, %v1600
    %v1605 = vpack.c.bf16 %v1601, %v1601
    %v1606 = vpack.c.bf16 %v1602, %v1602
    %v1607 = vld [vmem:[#allocation4] sm:$0xff]
    %v1608 = vld [vmem:[#allocation4 + $0x8] sm:$0xff]
    %v1609 = vld [vmem:[#allocation4 + $0x10] sm:$0xff]
    %v1610 = vld [vmem:[#allocation4 + $0x18] sm:$0xff]
    %v1611 = vld [vmem:[#allocation4 + $0x20] sm:$0xff]
    %v1612 = vld [vmem:[#allocation4 + $0x28] sm:$0xff]
    %v1613 = vld [vmem:[#allocation4 + $0x30] sm:$0xff]
    %v1614 = vld [vmem:[#allocation4 + $0x38] sm:$0xff]
    %v1615 = vld [vmem:[#allocation4 + $0x40] sm:$0xff]
    %v1616 = vld [vmem:[#allocation4 + $0x48] sm:$0xff]
    %v1617 = vld [vmem:[#allocation4 + $0x50] sm:$0xff]
    %v1618 = vld [vmem:[#allocation4 + $0x58] sm:$0xff]
    %v1619 = vld [vmem:[#allocation4 + $0x60] sm:$0xff]
    %v1620 = vld [vmem:[#allocation4 + $0x68] sm:$0xff]
    %v1621 = vld [vmem:[#allocation4 + $0x70] sm:$0xff]
    %v1622 = vld [vmem:[#allocation4 + $0x78] sm:$0xff]
    %v1623 = vld [vmem:[#allocation4 + $0x80] sm:$0xff]
    %v1624 = vld [vmem:[#allocation4 + $0x88] sm:$0xff]
    %v1625 = vld [vmem:[#allocation4 + $0x90] sm:$0xff]
    %v1626 = vld [vmem:[#allocation4 + $0x98] sm:$0xff]
    %v1627 = vld [vmem:[#allocation4 + $0xa0] sm:$0xff]
    %v1628 = vld [vmem:[#allocation4 + $0xa8] sm:$0xff]
    %v1629 = vld [vmem:[#allocation4 + $0xb0] sm:$0xff]
    %v1630 = vld [vmem:[#allocation4 + $0xb8] sm:$0xff]
    %v1631 = vld [vmem:[#allocation4 + $0xc0] sm:$0xff]
    %v1632 = vld [vmem:[#allocation4 + $0xc8] sm:$0xff]
    %v1633 = vld [vmem:[#allocation4 + $0xd0] sm:$0xff]
    %v1634 = vld [vmem:[#allocation4 + $0xd8] sm:$0xff]
    %v1635 = vld [vmem:[#allocation4 + $0xe0] sm:$0xff]
    %v1636 = vld [vmem:[#allocation4 + $0xe8] sm:$0xff]
    %v1637 = vld [vmem:[#allocation4 + $0xf0] sm:$0xff]
    %v1638 = vld [vmem:[#allocation4 + $0xf8] sm:$0xff]
    %v1639 = vld [vmem:[#allocation4 + $0x100] sm:$0xff]
    %v1640 = vld [vmem:[#allocation4 + $0x108] sm:$0xff]
    %v1641 = vld [vmem:[#allocation4 + $0x110] sm:$0xff]
    %v1642 = vld [vmem:[#allocation4 + $0x118] sm:$0xff]
    %v1643 = vld [vmem:[#allocation4 + $0x120] sm:$0xff]
    %v1644 = vld [vmem:[#allocation4 + $0x128] sm:$0xff]
    %v1645 = vld [vmem:[#allocation4 + $0x130] sm:$0xff]
    %v1646 = vld [vmem:[#allocation4 + $0x138] sm:$0xff]
    %v1647 = vld [vmem:[#allocation4 + $0x140] sm:$0xff]
    %v1648 = vld [vmem:[#allocation4 + $0x148] sm:$0xff]
    %v1649 = vld [vmem:[#allocation4 + $0x150] sm:$0xff]
    %v1650 = vld [vmem:[#allocation4 + $0x158] sm:$0xff]
    %v1651 = vld [vmem:[#allocation4 + $0x160] sm:$0xff]
    %v1652 = vld [vmem:[#allocation4 + $0x168] sm:$0xff]
    %v1653 = vld [vmem:[#allocation4 + $0x170] sm:$0xff]
    %v1654 = vld [vmem:[#allocation4 + $0x178] sm:$0xff]
    %v1655 = vld [vmem:[#allocation4 + $0x180] sm:$0xff]
    %v1656 = vld [vmem:[#allocation4 + $0x188] sm:$0xff]
    %v1657 = vld [vmem:[#allocation4 + $0x190] sm:$0xff]
    %v1658 = vld [vmem:[#allocation4 + $0x198] sm:$0xff]
    %v1659 = vld [vmem:[#allocation4 + $0x1a0] sm:$0xff]
    %v1660 = vld [vmem:[#allocation4 + $0x1a8] sm:$0xff]
    %v1661 = vld [vmem:[#allocation4 + $0x1b0] sm:$0xff]
    %v1662 = vld [vmem:[#allocation4 + $0x1b8] sm:$0xff]
    %v1663 = vld [vmem:[#allocation4 + $0x1c0] sm:$0xff]
    %v1664 = vld [vmem:[#allocation4 + $0x1c8] sm:$0xff]
    %v1665 = vld [vmem:[#allocation4 + $0x1d0] sm:$0xff]
    %v1666 = vld [vmem:[#allocation4 + $0x1d8] sm:$0xff]
    %v1667 = vld [vmem:[#allocation4 + $0x1e0] sm:$0xff]
    %v1668 = vld [vmem:[#allocation4 + $0x1e8] sm:$0xff]
    %v1669 = vld [vmem:[#allocation4 + $0x1f0] sm:$0xff]
    %v1670 = vld [vmem:[#allocation4 + $0x1f8] sm:$0xff]
    %v1671 = vld [vmem:[%s4] sm:$0x3]
    %v1673 = vlaneseq
    %v1674 = vshrl.u32 %v1673, 7
    %v1675 = vsub.s32 0, %v1674
    %v1676 = vrot.slane %v1671, %v1675
    %v1677 = vlaneseq
    %v1678 = vshrl.u32 %v1677, 7
    %v1679 = vsub.s32 1, %v1678
    %v1680 = vrot.slane %v1671, %v1679
    %v1747 = vunpack.c.l.b16 %v1607
    %v1748 = vunpack.c.h.b16 %v1607
    %v1749 = vunpack.c.l.b16 %v1608
    %v1750 = vunpack.c.h.b16 %v1608
    %v1751 = vunpack.c.l.b16 %v1609
    %v1752 = vunpack.c.h.b16 %v1609
    %v1753 = vunpack.c.l.b16 %v1610
    %v1754 = vunpack.c.h.b16 %v1610
    %v1755 = vunpack.c.l.b16 %v1611
    %v1756 = vunpack.c.h.b16 %v1611
    %v1757 = vunpack.c.l.b16 %v1612
    %v1758 = vunpack.c.h.b16 %v1612
    %v1759 = vunpack.c.l.b16 %v1613
    %v1760 = vunpack.c.h.b16 %v1613
    %v1761 = vunpack.c.l.b16 %v1614
    %v1762 = vunpack.c.h.b16 %v1614
    %v1763 = vunpack.c.l.b16 %v1615
    %v1764 = vunpack.c.h.b16 %v1615
    %v1765 = vunpack.c.l.b16 %v1616
    %v1766 = vunpack.c.h.b16 %v1616
    %v1767 = vunpack.c.l.b16 %v1617
    %v1768 = vunpack.c.h.b16 %v1617
    %v1769 = vunpack.c.l.b16 %v1618
    %v1770 = vunpack.c.h.b16 %v1618
    %v1771 = vunpack.c.l.b16 %v1619
    %v1772 = vunpack.c.h.b16 %v1619
    %v1773 = vunpack.c.l.b16 %v1620
    %v1774 = vunpack.c.h.b16 %v1620
    %v1775 = vunpack.c.l.b16 %v1621
    %v1776 = vunpack.c.h.b16 %v1621
    %v1777 = vunpack.c.l.b16 %v1622
    %v1778 = vunpack.c.h.b16 %v1622
    %v1779 = vunpack.c.l.b16 %v1623
    %v1780 = vunpack.c.h.b16 %v1623
    %v1781 = vunpack.c.l.b16 %v1624
    %v1782 = vunpack.c.h.b16 %v1624
    %v1783 = vunpack.c.l.b16 %v1625
    %v1784 = vunpack.c.h.b16 %v1625
    %v1785 = vunpack.c.l.b16 %v1626
    %v1786 = vunpack.c.h.b16 %v1626
    %v1787 = vunpack.c.l.b16 %v1627
    %v1788 = vunpack.c.h.b16 %v1627
    %v1789 = vunpack.c.l.b16 %v1628
    %v1790 = vunpack.c.h.b16 %v1628
    %v1791 = vunpack.c.l.b16 %v1629
    %v1792 = vunpack.c.h.b16 %v1629
    %v1793 = vunpack.c.l.b16 %v1630
    %v1794 = vunpack.c.h.b16 %v1630
    %v1795 = vunpack.c.l.b16 %v1631
    %v1796 = vunpack.c.h.b16 %v1631
    %v1797 = vunpack.c.l.b16 %v1632
    %v1798 = vunpack.c.h.b16 %v1632
    %v1799 = vunpack.c.l.b16 %v1633
    %v1800 = vunpack.c.h.b16 %v1633
    %v1801 = vunpack.c.l.b16 %v1634
    %v1802 = vunpack.c.h.b16 %v1634
    %v1803 = vunpack.c.l.b16 %v1635
    %v1804 = vunpack.c.h.b16 %v1635
    %v1805 = vunpack.c.l.b16 %v1636
    %v1806 = vunpack.c.h.b16 %v1636
    %v1807 = vunpack.c.l.b16 %v1637
    %v1808 = vunpack.c.h.b16 %v1637
    %v1809 = vunpack.c.l.b16 %v1638
    %v1810 = vunpack.c.h.b16 %v1638
    %v1811 = vunpack.c.l.b16 %v1639
    %v1812 = vunpack.c.h.b16 %v1639
    %v1813 = vunpack.c.l.b16 %v1640
    %v1814 = vunpack.c.h.b16 %v1640
    %v1815 = vunpack.c.l.b16 %v1641
    %v1816 = vunpack.c.h.b16 %v1641
    %v1817 = vunpack.c.l.b16 %v1642
    %v1818 = vunpack.c.h.b16 %v1642
    %v1819 = vunpack.c.l.b16 %v1643
    %v1820 = vunpack.c.h.b16 %v1643
    %v1821 = vunpack.c.l.b16 %v1644
    %v1822 = vunpack.c.h.b16 %v1644
    %v1823 = vunpack.c.l.b16 %v1645
    %v1824 = vunpack.c.h.b16 %v1645
    %v1825 = vunpack.c.l.b16 %v1646
    %v1826 = vunpack.c.h.b16 %v1646
    %v1827 = vunpack.c.l.b16 %v1647
    %v1828 = vunpack.c.h.b16 %v1647
    %v1829 = vunpack.c.l.b16 %v1648
    %v1830 = vunpack.c.h.b16 %v1648
    %v1831 = vunpack.c.l.b16 %v1649
    %v1832 = vunpack.c.h.b16 %v1649
    %v1833 = vunpack.c.l.b16 %v1650
    %v1834 = vunpack.c.h.b16 %v1650
    %v1835 = vunpack.c.l.b16 %v1651
    %v1836 = vunpack.c.h.b16 %v1651
    %v1837 = vunpack.c.l.b16 %v1652
    %v1838 = vunpack.c.h.b16 %v1652
    %v1839 = vunpack.c.l.b16 %v1653
    %v1840 = vunpack.c.h.b16 %v1653
    %v1841 = vunpack.c.l.b16 %v1654
    %v1842 = vunpack.c.h.b16 %v1654
    %v1843 = vunpack.c.l.b16 %v1655
    %v1844 = vunpack.c.h.b16 %v1655
    %v1845 = vunpack.c.l.b16 %v1656
    %v1846 = vunpack.c.h.b16 %v1656
    %v1847 = vunpack.c.l.b16 %v1657
    %v1848 = vunpack.c.h.b16 %v1657
    %v1849 = vunpack.c.l.b16 %v1658
    %v1850 = vunpack.c.h.b16 %v1658
    %v1851 = vunpack.c.l.b16 %v1659
    %v1852 = vunpack.c.h.b16 %v1659
    %v1853 = vunpack.c.l.b16 %v1660
    %v1854 = vunpack.c.h.b16 %v1660
    %v1855 = vunpack.c.l.b16 %v1661
    %v1856 = vunpack.c.h.b16 %v1661
    %v1857 = vunpack.c.l.b16 %v1662
    %v1858 = vunpack.c.h.b16 %v1662
    %v1859 = vunpack.c.l.b16 %v1663
    %v1860 = vunpack.c.h.b16 %v1663
    %v1861 = vunpack.c.l.b16 %v1664
    %v1862 = vunpack.c.h.b16 %v1664
    %v1863 = vunpack.c.l.b16 %v1665
    %v1864 = vunpack.c.h.b16 %v1665
    %v1865 = vunpack.c.l.b16 %v1666
    %v1866 = vunpack.c.h.b16 %v1666
    %v1867 = vunpack.c.l.b16 %v1667
    %v1868 = vunpack.c.h.b16 %v1667
    %v1869 = vunpack.c.l.b16 %v1668
    %v1870 = vunpack.c.h.b16 %v1668
    %v1871 = vunpack.c.l.b16 %v1669
    %v1872 = vunpack.c.h.b16 %v1669
    %v1873 = vunpack.c.l.b16 %v1670
    %v1874 = vunpack.c.h.b16 %v1670
    %v1875 = vpack.c.b16 %v1749, %v1747
    %v1876 = vpack.c.b16 %v1750, %v1748
    %v1877 = vpack.c.b16 %v1753, %v1751
    %v1878 = vpack.c.b16 %v1754, %v1752
    %v1879 = vpack.c.b16 %v1757, %v1755
    %v1880 = vpack.c.b16 %v1758, %v1756
    %v1881 = vpack.c.b16 %v1761, %v1759
    %v1882 = vpack.c.b16 %v1762, %v1760
    %v1883 = vpack.c.b16 %v1765, %v1763
    %v1884 = vpack.c.b16 %v1766, %v1764
    %v1885 = vpack.c.b16 %v1769, %v1767
    %v1886 = vpack.c.b16 %v1770, %v1768
    %v1887 = vpack.c.b16 %v1773, %v1771
    %v1888 = vpack.c.b16 %v1774, %v1772
    %v1889 = vpack.c.b16 %v1777, %v1775
    %v1890 = vpack.c.b16 %v1778, %v1776
    %v1891 = vpack.c.b16 %v1781, %v1779
    %v1892 = vpack.c.b16 %v1782, %v1780
    %v1893 = vpack.c.b16 %v1785, %v1783
    %v1894 = vpack.c.b16 %v1786, %v1784
    %v1895 = vpack.c.b16 %v1789, %v1787
    %v1896 = vpack.c.b16 %v1790, %v1788
    %v1897 = vpack.c.b16 %v1793, %v1791
    %v1898 = vpack.c.b16 %v1794, %v1792
    %v1899 = vpack.c.b16 %v1797, %v1795
    %v1900 = vpack.c.b16 %v1798, %v1796
    %v1901 = vpack.c.b16 %v1801, %v1799
    %v1902 = vpack.c.b16 %v1802, %v1800
    %v1903 = vpack.c.b16 %v1805, %v1803
    %v1904 = vpack.c.b16 %v1806, %v1804
    %v1905 = vpack.c.b16 %v1809, %v1807
    %v1906 = vpack.c.b16 %v1810, %v1808
    %v1907 = vpack.c.b16 %v1813, %v1811
    %v1908 = vpack.c.b16 %v1814, %v1812
    %v1909 = vpack.c.b16 %v1817, %v1815
    %v1910 = vpack.c.b16 %v1818, %v1816
    %v1911 = vpack.c.b16 %v1821, %v1819
    %v1912 = vpack.c.b16 %v1822, %v1820
    %v1913 = vpack.c.b16 %v1825, %v1823
    %v1914 = vpack.c.b16 %v1826, %v1824
    %v1915 = vpack.c.b16 %v1829, %v1827
    %v1916 = vpack.c.b16 %v1830, %v1828
    %v1917 = vpack.c.b16 %v1833, %v1831
    %v1918 = vpack.c.b16 %v1834, %v1832
    %v1919 = vpack.c.b16 %v1837, %v1835
    %v1920 = vpack.c.b16 %v1838, %v1836
    %v1921 = vpack.c.b16 %v1841, %v1839
    %v1922 = vpack.c.b16 %v1842, %v1840
    %v1923 = vpack.c.b16 %v1845, %v1843
    %v1924 = vpack.c.b16 %v1846, %v1844
    %v1925 = vpack.c.b16 %v1849, %v1847
    %v1926 = vpack.c.b16 %v1850, %v1848
    %v1927 = vpack.c.b16 %v1853, %v1851
    %v1928 = vpack.c.b16 %v1854, %v1852
    %v1929 = vpack.c.b16 %v1857, %v1855
    %v1930 = vpack.c.b16 %v1858, %v1856
    %v1931 = vpack.c.b16 %v1861, %v1859
    %v1932 = vpack.c.b16 %v1862, %v1860
    %v1933 = vpack.c.b16 %v1865, %v1863
    %v1934 = vpack.c.b16 %v1866, %v1864
    %v1935 = vpack.c.b16 %v1869, %v1867
    %v1936 = vpack.c.b16 %v1870, %v1868
    %v1937 = vpack.c.b16 %v1873, %v1871
    %v1938 = vpack.c.b16 %v1874, %v1872
    %2003 = vmatprep.subr.bf16.mxu0 %v1876
    %2004 = vmatpush1.bf16.msra.mxu0 %v1875
    %2005 = vmatprep.subr.bf16.mxu0 %v1878
    %2006 = vmatpush1.bf16.msra.mxu0 %v1877
    %2007 = vmatprep.subr.bf16.mxu0 %v1880
    %2008 = vmatpush1.bf16.msra.mxu0 %v1879
    %2009 = vmatprep.subr.bf16.mxu0 %v1882
    %2010 = vmatpush1.bf16.msra.mxu0 %v1881
    %2011 = vmatprep.subr.bf16.mxu0 %v1884
    %2012 = vmatpush1.bf16.msra.mxu0 %v1883
    %2013 = vmatprep.subr.bf16.mxu0 %v1886
    %2014 = vmatpush1.bf16.msra.mxu0 %v1885
    %2015 = vmatprep.subr.bf16.mxu0 %v1888
    %2016 = vmatpush1.bf16.msra.mxu0 %v1887
    %2017 = vmatprep.subr.bf16.mxu0 %v1890
    %2018 = vmatpush1.bf16.msra.mxu0 %v1889
    %2019 = vmatprep.subr.bf16.mxu0 %v1892
    %2020 = vmatpush1.bf16.msra.mxu0 %v1891
    %2021 = vmatprep.subr.bf16.mxu0 %v1894
    %2022 = vmatpush1.bf16.msra.mxu0 %v1893
    %2023 = vmatprep.subr.bf16.mxu0 %v1896
    %2024 = vmatpush1.bf16.msra.mxu0 %v1895
    %2025 = vmatprep.subr.bf16.mxu0 %v1898
    %2026 = vmatpush1.bf16.msra.mxu0 %v1897
    %2027 = vmatprep.subr.bf16.mxu0 %v1900
    %2028 = vmatpush1.bf16.msra.mxu0 %v1899
    %2029 = vmatprep.subr.bf16.mxu0 %v1902
    %2030 = vmatpush1.bf16.msra.mxu0 %v1901
    %2031 = vmatprep.subr.bf16.mxu0 %v1904
    %2032 = vmatpush1.bf16.msra.mxu0 %v1903
    %2033 = vmatprep.subr.bf16.mxu0 %v1906
    %2034 = vmatpush1.bf16.msra.mxu0 %v1905
    %2035 = vmatprep.mubr.bf16.mxu0 %v1604
    %2036 = vmatmul.mubr.bf16.gmra.mrb[0].mxu0 %v1603
    %v2037 = vpop.f32.mrb[0].mxu0
    %v2038 = vadd.f32 %v1676, %v2037
    %v2039 = vpop.f32.mrb[0].mxu0
    %v2040 = vadd.f32 %v1680, %v2039
    %v2041 = vpop.f32.mrb[0].mxu0
    %v2042 = vpop.f32.mrb[0].mxu0
    %2043 = vdwg.mxu0
    %2044 = vmatprep.subr.bf16.mxu0 %v1908
    %2045 = vmatpush1.bf16.msra.mxu0 %v1907
    %2046 = vmatprep.subr.bf16.mxu0 %v1910
    %2047 = vmatpush1.bf16.msra.mxu0 %v1909
    %2048 = vmatprep.subr.bf16.mxu0 %v1912
    %2049 = vmatpush1.bf16.msra.mxu0 %v1911
    %2050 = vmatprep.subr.bf16.mxu0 %v1914
    %2051 = vmatpush1.bf16.msra.mxu0 %v1913
    %2052 = vmatprep.subr.bf16.mxu0 %v1916
    %2053 = vmatpush1.bf16.msra.mxu0 %v1915
    %2054 = vmatprep.subr.bf16.mxu0 %v1918
    %2055 = vmatpush1.bf16.msra.mxu0 %v1917
    %2056 = vmatprep.subr.bf16.mxu0 %v1920
    %2057 = vmatpush1.bf16.msra.mxu0 %v1919
    %2058 = vmatprep.subr.bf16.mxu0 %v1922
    %2059 = vmatpush1.bf16.msra.mxu0 %v1921
    %2060 = vmatprep.subr.bf16.mxu0 %v1924
    %2061 = vmatpush1.bf16.msra.mxu0 %v1923
    %2062 = vmatprep.subr.bf16.mxu0 %v1926
    %2063 = vmatpush1.bf16.msra.mxu0 %v1925
    %2064 = vmatprep.subr.bf16.mxu0 %v1928
    %2065 = vmatpush1.bf16.msra.mxu0 %v1927
    %2066 = vmatprep.subr.bf16.mxu0 %v1930
    %2067 = vmatpush1.bf16.msra.mxu0 %v1929
    %2068 = vmatprep.subr.bf16.mxu0 %v1932
    %2069 = vmatpush1.bf16.msra.mxu0 %v1931
    %2070 = vmatprep.subr.bf16.mxu0 %v1934
    %2071 = vmatpush1.bf16.msra.mxu0 %v1933
    %2072 = vmatprep.subr.bf16.mxu0 %v1936
    %2073 = vmatpush1.bf16.msra.mxu0 %v1935
    %2074 = vmatprep.subr.bf16.mxu0 %v1938
    %2075 = vmatpush1.bf16.msra.mxu0 %v1937
    %2076 = vmatprep.mubr.bf16.mxu0 %v1606
    %2077 = vmatmul.mubr.bf16.gmra.mrb[0].mxu0 %v1605
    %v2078 = vpop.f32.mrb[0].mxu0
    %v2079 = vadd.f32 %v2038, %v2078
    %v2080 = vpop.f32.mrb[0].mxu0
    %v2081 = vadd.f32 %v2040, %v2080
    %v2082 = vpop.f32.mrb[0].mxu0
    %v2083 = vpop.f32.mrb[0].mxu0
    %2084 = vdwg.mxu0
    %v2085 = vmax.f32 %v2079, 0.0
    %v2086 = vmax.f32 %v2081, 0.0
    %v2087 = vpack.c.bf16 %v2085, %v2085
    %v2088 = vpack.c.bf16 %v2086, %v2086
    %v2089 = vld [vmem:[%s5] sm:$0xf]
    %v2090 = vld [vmem:[%s5 + $0x4] sm:$0xf]
    %v2091 = vld [vmem:[%s5 + $0x8] sm:$0xf]
    %v2092 = vld [vmem:[%s5 + $0xc] sm:$0xf]
    %v2093 = vld [vmem:[%s5 + $0x10] sm:$0xf]
    %v2094 = vld [vmem:[%s5 + $0x14] sm:$0xf]
    %v2095 = vld [vmem:[%s5 + $0x18] sm:$0xf]
    %v2096 = vld [vmem:[%s5 + $0x1c] sm:$0xf]
    %v2097 = vld [vmem:[%s5 + $0x20] sm:$0xf]
    %v2098 = vld [vmem:[%s5 + $0x24] sm:$0xf]
    %v2099 = vld [vmem:[%s5 + $0x28] sm:$0xf]
    %v2100 = vld [vmem:[%s5 + $0x2c] sm:$0xf]
    %v2101 = vld [vmem:[%s5 + $0x30] sm:$0xf]
    %v2102 = vld [vmem:[%s5 + $0x34] sm:$0xf]
    %v2103 = vld [vmem:[%s5 + $0x38] sm:$0xf]
    %v2104 = vld [vmem:[%s5 + $0x3c] sm:$0xf]
    %v2105 = vld [vmem:[%s5 + $0x40] sm:$0xf]
    %v2106 = vld [vmem:[%s5 + $0x44] sm:$0xf]
    %v2107 = vld [vmem:[%s5 + $0x48] sm:$0xf]
    %v2108 = vld [vmem:[%s5 + $0x4c] sm:$0xf]
    %v2109 = vld [vmem:[%s5 + $0x50] sm:$0xf]
    %v2110 = vld [vmem:[%s5 + $0x54] sm:$0xf]
    %v2111 = vld [vmem:[%s5 + $0x58] sm:$0xf]
    %v2112 = vld [vmem:[%s5 + $0x5c] sm:$0xf]
    %v2113 = vld [vmem:[%s5 + $0x60] sm:$0xf]
    %v2114 = vld [vmem:[%s5 + $0x64] sm:$0xf]
    %v2115 = vld [vmem:[%s5 + $0x68] sm:$0xf]
    %v2116 = vld [vmem:[%s5 + $0x6c] sm:$0xf]
    %v2117 = vld [vmem:[%s5 + $0x70] sm:$0xf]
    %v2118 = vld [vmem:[%s5 + $0x74] sm:$0xf]
    %v2119 = vld [vmem:[%s5 + $0x78] sm:$0xf]
    %v2120 = vld [vmem:[%s5 + $0x7c] sm:$0xf]
    %v2121 = vld [vmem:[%s6] sm:$0x1]
    %v2123 = vlaneseq
    %v2124 = vshrl.u32 %v2123, 7
    %v2125 = vsub.s32 0, %v2124
    %v2126 = vrot.slane %v2121, %v2125
    %v2160 = vunpack.c.l.b16 %v2089
    %v2161 = vunpack.c.l.b16 %v2090
    %v2162 = vunpack.c.l.b16 %v2091
    %v2163 = vunpack.c.l.b16 %v2092
    %v2164 = vunpack.c.l.b16 %v2093
    %v2165 = vunpack.c.l.b16 %v2094
    %v2166 = vunpack.c.l.b16 %v2095
    %v2167 = vunpack.c.l.b16 %v2096
    %v2168 = vunpack.c.l.b16 %v2097
    %v2169 = vunpack.c.l.b16 %v2098
    %v2170 = vunpack.c.l.b16 %v2099
    %v2171 = vunpack.c.l.b16 %v2100
    %v2172 = vunpack.c.l.b16 %v2101
    %v2173 = vunpack.c.l.b16 %v2102
    %v2174 = vunpack.c.l.b16 %v2103
    %v2175 = vunpack.c.l.b16 %v2104
    %v2176 = vunpack.c.l.b16 %v2105
    %v2177 = vunpack.c.l.b16 %v2106
    %v2178 = vunpack.c.l.b16 %v2107
    %v2179 = vunpack.c.l.b16 %v2108
    %v2180 = vunpack.c.l.b16 %v2109
    %v2181 = vunpack.c.l.b16 %v2110
    %v2182 = vunpack.c.l.b16 %v2111
    %v2183 = vunpack.c.l.b16 %v2112
    %v2184 = vunpack.c.l.b16 %v2113
    %v2185 = vunpack.c.l.b16 %v2114
    %v2186 = vunpack.c.l.b16 %v2115
    %v2187 = vunpack.c.l.b16 %v2116
    %v2188 = vunpack.c.l.b16 %v2117
    %v2189 = vunpack.c.l.b16 %v2118
    %v2190 = vunpack.c.l.b16 %v2119
    %v2191 = vunpack.c.l.b16 %v2120
    %v2192 = vpack.c.b16 %v2161, %v2160
    %v2193 = vpack.c.b16 %v2163, %v2162
    %v2194 = vpack.c.b16 %v2165, %v2164
    %v2195 = vpack.c.b16 %v2167, %v2166
    %v2196 = vpack.c.b16 %v2169, %v2168
    %v2197 = vpack.c.b16 %v2171, %v2170
    %v2198 = vpack.c.b16 %v2173, %v2172
    %v2199 = vpack.c.b16 %v2175, %v2174
    %v2200 = vpack.c.b16 %v2177, %v2176
    %v2201 = vpack.c.b16 %v2179, %v2178
    %v2202 = vpack.c.b16 %v2181, %v2180
    %v2203 = vpack.c.b16 %v2183, %v2182
    %v2204 = vpack.c.b16 %v2185, %v2184
    %v2205 = vpack.c.b16 %v2187, %v2186
    %v2206 = vpack.c.b16 %v2189, %v2188
    %v2207 = vpack.c.b16 %v2191, %v2190
    %2224 = vmatprep.subr.bf16.mxu0 0
    %2225 = vmatpush1.bf16.msra.mxu0 %v2192
    %2226 = vmatprep.subr.bf16.mxu0 0
    %2227 = vmatpush1.bf16.msra.mxu0 %v2193
    %2228 = vmatprep.subr.bf16.mxu0 0
    %2229 = vmatpush1.bf16.msra.mxu0 %v2194
    %2230 = vmatprep.subr.bf16.mxu0 0
    %2231 = vmatpush1.bf16.msra.mxu0 %v2195
    %2232 = vmatprep.subr.bf16.mxu0 0
    %2233 = vmatpush1.bf16.msra.mxu0 %v2196
    %2234 = vmatprep.subr.bf16.mxu0 0
    %2235 = vmatpush1.bf16.msra.mxu0 %v2197
    %2236 = vmatprep.subr.bf16.mxu0 0
    %2237 = vmatpush1.bf16.msra.mxu0 %v2198
    %2238 = vmatprep.subr.bf16.mxu0 0
    %2239 = vmatpush1.bf16.msra.mxu0 %v2199
    %2240 = vmatprep.subr.bf16.mxu0 0
    %2241 = vmatpush1.bf16.msra.mxu0 %v2200
    %2242 = vmatprep.subr.bf16.mxu0 0
    %2243 = vmatpush1.bf16.msra.mxu0 %v2201
    %2244 = vmatprep.subr.bf16.mxu0 0
    %2245 = vmatpush1.bf16.msra.mxu0 %v2202
    %2246 = vmatprep.subr.bf16.mxu0 0
    %2247 = vmatpush1.bf16.msra.mxu0 %v2203
    %2248 = vmatprep.subr.bf16.mxu0 0
    %2249 = vmatpush1.bf16.msra.mxu0 %v2204
    %2250 = vmatprep.subr.bf16.mxu0 0
    %2251 = vmatpush1.bf16.msra.mxu0 %v2205
    %2252 = vmatprep.subr.bf16.mxu0 0
    %2253 = vmatpush1.bf16.msra.mxu0 %v2206
    %2254 = vmatprep.subr.bf16.mxu0 0
    %2255 = vmatpush1.bf16.msra.mxu0 %v2207
    %2256 = vmatprep.mubr.bf16.mxu0 %v2088
    %2257 = vmatmul.mubr.bf16.gmra.mrb[0].mxu0 %v2087
    %v2258 = vpop.f32.mrb[0].mxu0
    %v2259 = vadd.f32 %v2126, %v2258
    %v2260 = vpop.f32.mrb[0].mxu0
    %v2261 = vpop.f32.mrb[0].mxu0
    %v2262 = vpop.f32.mrb[0].mxu0
    %2263 = vdwg.mxu0
    %v2264 = vpack.c.bf16 %v2259, %v2259
    %2265 = vst [vmem:[%s7] sm:$0xf] %v2264
    // Predicated region
    $region38: #{mnist_net_forward.1} parent=1 // pred_check
      _
    $region39: #{mnist_net_forward.1} parent=1 // pred_check_branch
      %2267 = sbr.rel (0) target = $region41
    $region40: #{mnist_net_forward.1} parent=1 // pred_region
      _
    $region41: #{mnist_net_forward.1} parent=1 // pred_fallthru
      _
    // Predicated region
    $region42: #{mnist_net_forward.1} parent=1 // pred_check
      _
    $region43: #{mnist_net_forward.1} parent=1 // pred_check_branch
      %2269 = sbr.rel (0) target = $region45
    $region44: #{mnist_net_forward.1} parent=1 // pred_region
      _
    $region45: #{mnist_net_forward.1} parent=1 // pred_fallthru
      _
    %2270 = vsyncpa [#allocation3], 1
    %2271 = vsyncpa [#allocation5], 1

</llo_original>
